<compile_context>
chip_gen: v7x
topology: tpu7x:2x2x1
jax: 0.10.0
libtpu: 0.0.40
codegen_flags: <defaults>
</compile_context>

<pallas_src>
import functools
import math

import jax
import jax.numpy as jnp
from jax.experimental import pallas as pl
from jax.experimental.pallas import tpu as pltpu

_VMEM_LIMIT = 32 * 1024 * 1024          # above v5e's 16 MiB scoped default, safe on v7x
_SQRT_HALF = 1.0 / math.sqrt(2.0)


# ----------------------------------------------------------------------------
# In-kernel helpers
# ----------------------------------------------------------------------------
def _layernorm_f32(x, gamma, beta, eps=1e-5):
    xf = x.astype(jnp.float32)
    mu = jnp.mean(xf, axis=-1, keepdims=True)
    var = jnp.mean((xf - mu) ** 2, axis=-1, keepdims=True)
    xf = (xf - mu) * jax.lax.rsqrt(var + eps)          # PyTorch LayerNorm eps
    return xf * gamma.astype(jnp.float32) + beta.astype(jnp.float32)


def _gelu_exact(x):
    # exact (erf) GELU, matching torch's gelu default; f32 elementwise (v5e-safe)
    return 0.5 * x * (1.0 + jax.lax.erf(x * _SQRT_HALF))


# ----------------------------------------------------------------------------
# Kernel 1/2: [optional LayerNorm] -> matmul + bias, row x dout tiled
# ----------------------------------------------------------------------------
def _proj_kernel(*refs, has_ln):
    if has_ln:
        x_ref, g_ref, bln_ref, w_ref, b_ref, o_ref, xn_ref = refs

        @pl.when(pl.program_id(1) == 0)          # LN once per row tile, reused over j
        def _():
            xn_ref[...] = _layernorm_f32(
                x_ref[...], g_ref[...], bln_ref[...]).astype(xn_ref.dtype)

        x = xn_ref[...]
    else:
        x_ref, w_ref, b_ref, o_ref = refs
        x = x_ref[...]

    acc = jnp.dot(x, w_ref[...], preferred_element_type=jnp.float32)
    acc = acc + b_ref[...].astype(jnp.float32)
    o_ref[...] = acc.astype(o_ref.dtype)


def fused_linear(x2d, w, b, *, ln=None, tm=256, tn=512):
    """y = LN?(x) @ w + b, tiled over (rows, dout)."""
    n, din = x2d.shape
    dout = w.shape[1]
    tm = min(tm, n)
    tn = min(tn, dout)
    grid = (pl.cdiv(n, tm), pl.cdiv(dout, tn))

    in_specs = [pl.BlockSpec((tm, din), lambda i, j: (i, 0))]
    args = [x2d]
    scratch_shapes = []
    if ln is not None:
        gamma, beta = ln
        in_specs += [pl.BlockSpec((1, din), lambda i, j: (0, 0)),
                     pl.BlockSpec((1, din), lambda i, j: (0, 0))]
        args += [gamma.reshape(1, din), beta.reshape(1, din)]
        scratch_shapes = [pltpu.VMEM((tm, din), x2d.dtype)]
    in_specs += [pl.BlockSpec((din, tn), lambda i, j: (0, j)),
                 pl.BlockSpec((1, tn), lambda i, j: (0, j))]
    args += [w, b.reshape(1, dout)]

    dims = ("parallel", "arbitrary") if ln is not None else ("parallel", "parallel")
    return pl.pallas_call(
        functools.partial(_proj_kernel, has_ln=ln is not None),
        out_shape=jax.ShapeDtypeStruct((n, dout), x2d.dtype),
        grid=grid,
        in_specs=in_specs,
        out_specs=pl.BlockSpec((tm, tn), lambda i, j: (i, j)),
        scratch_shapes=scratch_shapes,
        compiler_params=pltpu.CompilerParams(
            dimension_semantics=dims, vmem_limit_bytes=_VMEM_LIMIT),
    )(*args)


# ----------------------------------------------------------------------------
# Kernel 3: attention + out-projection + residual, grid = (B, Sq tiles)
# ----------------------------------------------------------------------------
def _mha_oproj_kernel(q_ref, kT_ref, v_ref, wo_ref, bo_ref, res_ref,
                      o_ref, attn_ref, *, scale):
    q = q_ref[0]                       # (H, tq, dh)   head-major, no lane slicing
    kT = kT_ref[0]                     # (H, dh, Sk)   pre-transposed -> no in-kernel vxpose
    v = v_ref[0]                       # (H, Sk, dh)

    # scores: batched-over-heads MXU dot
    s = jnp.einsum("hqd,hdk->hqk", q, kT,
                   preferred_element_type=jnp.float32) * scale        # (H, tq, Sk) f32
    m = jnp.max(s, axis=-1, keepdims=True)
    p = jnp.exp(s - m)
    p = p / jnp.sum(p, axis=-1, keepdims=True)   # exact normalization (torch parity)

    ctx = jnp.einsum("hqk,hkd->hqd", p.astype(v.dtype), v,
                     preferred_element_type=jnp.float32)               # (H, tq, dh)

    # fused out-projection: per-head (tq,dh)@(dh,D) batched dot, heads summed on the VPU,
    # so the head-major context never needs an XLU transpose back to (tq, D).
    # TODO(synk): for very large H*tq*D also tile D here to bound the f32 intermediate.
    wo = wo_ref[...]                                                   # (H, dh, D)
    o_parts = jnp.einsum("hqd,hdn->hqn", ctx.astype(wo.dtype), wo,
                         preferred_element_type=jnp.float32)           # (H, tq, D)
    out = jnp.sum(o_parts, axis=0)
    out = out + bo_ref[...].astype(jnp.float32) + res_ref[0].astype(jnp.float32)

    o_ref[0] = out.astype(o_ref.dtype)
    attn_ref[0] = jnp.mean(p, axis=0).astype(attn_ref.dtype)           # avg over heads


def attention_block(q2d, kv2d, key_resid, wo, bo, nhead, *, tq=256):
    """q2d: (B*Sq, D); kv2d: (B*Sk, 2D); key_resid: (B, Sq, D).

    Returns tgt = key + out_proj(MHA(q, k, v)) and head-averaged attention weights.
    """
    B, Sq, D = key_resid.shape
    assert D % nhead == 0, "d_model must be divisible by nhead"
    dh = D // nhead
    Sk = kv2d.shape[0] // B

    # Head-major layout plumbing in the wrapper (cheap XLA transposes, once per call).
    q = q2d.reshape(B, Sq, nhead, dh).transpose(0, 2, 1, 3)            # (B, H, Sq, dh)
    kT = kv2d[:, :D].reshape(B, Sk, nhead, dh).transpose(0, 2, 3, 1)   # (B, H, dh, Sk)
    v = kv2d[:, D:].reshape(B, Sk, nhead, dh).transpose(0, 2, 1, 3)    # (B, H, Sk, dh)
    wo3 = wo.reshape(nhead, dh, D)

    tq = min(tq, Sq)
    grid = (B, pl.cdiv(Sq, tq))
    kernel = functools.partial(_mha_oproj_kernel, scale=1.0 / math.sqrt(dh))

    return pl.pallas_call(
        kernel,
        out_shape=(jax.ShapeDtypeStruct((B, Sq, D), key_resid.dtype),
                   jax.ShapeDtypeStruct((B, Sq, Sk), q2d.dtype)),
        grid=grid,
        in_specs=[
            pl.BlockSpec((1, nhead, tq, dh), lambda b, i: (b, 0, i, 0)),
            pl.BlockSpec((1, nhead, dh, Sk), lambda b, i: (b, 0, 0, 0)),
            pl.BlockSpec((1, nhead, Sk, dh), lambda b, i: (b, 0, 0, 0)),
            pl.BlockSpec((nhead, dh, D), lambda b, i: (0, 0, 0)),
            pl.BlockSpec((1, D), lambda b, i: (0, 0)),
            pl.BlockSpec((1, tq, D), lambda b, i: (b, i, 0)),
        ],
        out_specs=(pl.BlockSpec((1, tq, D), lambda b, i: (b, i, 0)),
                   pl.BlockSpec((1, tq, Sk), lambda b, i: (b, i, 0))),
        compiler_params=pltpu.CompilerParams(
            dimension_semantics=("parallel", "parallel"),
            vmem_limit_bytes=_VMEM_LIMIT),
    )(q, kT, v, wo3, bo.reshape(1, D), key_resid)


# ----------------------------------------------------------------------------
# Kernel 4: fused LN2 + linear1 + GELU + linear2 + residual (dff-tiled reduction)
# ----------------------------------------------------------------------------
def _ffn_kernel(x_ref, g_ref, bln_ref, w1_ref, b1_ref, w2_ref, b2_ref,
                o_ref, xn_ref, acc_ref):
    j = pl.program_id(1)

    @pl.when(j == 0)
    def _():
        xn_ref[...] = _layernorm_f32(
            x_ref[...], g_ref[...], bln_ref[...]).astype(xn_ref.dtype)
        acc_ref[...] = jnp.zeros_like(acc_ref)

    h = jnp.dot(xn_ref[...], w1_ref[...], preferred_element_type=jnp.float32)
    h = _gelu_exact(h + b1_ref[...].astype(jnp.float32))
    acc_ref[...] += jnp.dot(h.astype(w2_ref.dtype), w2_ref[...],
                            preferred_element_type=jnp.float32)

    @pl.when(j == pl.num_programs(1) - 1)
    def _():
        out = acc_ref[...] + b2_ref[...].astype(jnp.float32) + x_ref[...].astype(jnp.float32)
        o_ref[...] = out.astype(o_ref.dtype)


def fused_ffn(tgt2d, ln2, w1, b1, w2, b2, *, tm=256, tf=512):
    """out = tgt + linear2(gelu(linear1(LN2(tgt)))), dff never written to HBM."""
    n, d = tgt2d.shape
    dff = w1.shape[1]
    tm = min(tm, n)
    tf = min(tf, dff)
    gamma, beta = ln2
    grid = (pl.cdiv(n, tm), pl.cdiv(dff, tf))

    return pl.pallas_call(
        _ffn_kernel,
        out_shape=jax.ShapeDtypeStruct((n, d), tgt2d.dtype),
        grid=grid,
        in_specs=[
            pl.BlockSpec((tm, d), lambda i, j: (i, 0)),
            pl.BlockSpec((1, d), lambda i, j: (0, 0)),
            pl.BlockSpec((1, d), lambda i, j: (0, 0)),
            pl.BlockSpec((d, tf), lambda i, j: (0, j)),
            pl.BlockSpec((1, tf), lambda i, j: (0, j)),
            pl.BlockSpec((tf, d), lambda i, j: (j, 0)),
            pl.BlockSpec((1, d), lambda i, j: (0, 0)),
        ],
        out_specs=pl.BlockSpec((tm, d), lambda i, j: (i, 0)),
        scratch_shapes=[pltpu.VMEM((tm, d), tgt2d.dtype),
                        pltpu.VMEM((tm, d), jnp.float32)],
        compiler_params=pltpu.CompilerParams(
            dimension_semantics=("parallel", "arbitrary"),
            vmem_limit_bytes=_VMEM_LIMIT),
    )(tgt2d, gamma.reshape(1, d), beta.reshape(1, d),
      w1, b1.reshape(1, dff), w2, b2.reshape(1, d))


# ----------------------------------------------------------------------------
# PreTransformerSummaryLayer forward (dropout == 0, masks == None, use_feedforward=True)
# ----------------------------------------------------------------------------
def pre_transformer_summary_forward(key_tok, memory, params, nhead):
    # TODO(synk): memory_mask / memory_key_padding_mask not implemented (None path only).
    B, Sq, D = key_tok.shape
    Sk = memory.shape[1]
    x = key_tok.reshape(B * Sq, D)
    mem = memory.reshape(B * Sk, D)

    # 1) q = LN1(key) @ Wq + bq      (LayerNorm fused into the Q projection)
    q = fused_linear(x, params["wq"], params["bq"],
                     ln=(params["ln1_g"], params["ln1_b"]))

    # 2) [k|v] = memory @ [Wk|Wv] + [bk|bv]  (memory is NOT layer-normed in this module)
    kv = fused_linear(mem, params["wkv"], params["bkv"])

    # 3) tgt = key + out_proj(MHA(q, k, v))  (out-proj + residual fused into attention)
    tgt, attn_w = attention_block(q, kv, key_tok, params["wo"], params["bo"], nhead)

    # 4) tgt = tgt + linear2(gelu(linear1(LN2(tgt))))  (single fused kernel)
    out = fused_ffn(tgt.reshape(B * Sq, D),
                    (params["ln2_g"], params["ln2_b"]),
                    params["w1"], params["b1"], params["w2"], params["b2"])

    return out.reshape(B, Sq, D), attn_w


# ----------------------------------------------------------------------------
# Deterministic parameter init (weights stored as (Din, Dout))
# ----------------------------------------------------------------------------
def init_params(key, d_model, nhead, dim_feedforward):
    ks = jax.random.split(key, 12)
    s = 0.02

    def rand(k, shape):
        return jax.random.normal(k, shape, dtype=jnp.float32) * s

    return {
        "wq": rand(ks[0], (d_model, d_model)),
        "bq": rand(ks[1], (d_model,)),
        "wkv": rand(ks[2], (d_model, 2 * d_model)),   # [Wk | Wv] concatenated on out dim
        "bkv": rand(ks[3], (2 * d_model,)),
        "wo": rand(ks[4], (d_model, d_model)),
        "bo": rand(ks[5], (d_model,)),
        "w1": rand(ks[6], (d_model, dim_feedforward)),
        "b1": rand(ks[7], (dim_feedforward,)),
        "w2": rand(ks[8], (dim_feedforward, d_model)),
        "b2": rand(ks[9], (d_model,)),
        "ln1_g": jnp.ones((d_model,), jnp.float32),
        "ln1_b": jnp.zeros((d_model,), jnp.float32),
        "ln2_g": jnp.ones((d_model,), jnp.float32),
        "ln2_b": jnp.zeros((d_model,), jnp.float32),
    }


if __name__ == "__main__":
    d_model, nhead, dim_feedforward = 32, 4, 128
    B, S_key, S_mem = 2, 8, 16

    root = jax.random.PRNGKey(0)
    k_key, k_mem, k_par = jax.random.split(root, 3)
    key_tok = jax.random.normal(k_key, (B, S_key, d_model), dtype=jnp.float32)
    memory = jax.random.normal(k_mem, (B, S_mem, d_model), dtype=jnp.float32)
    params = init_params(k_par, d_model, nhead, dim_feedforward)

    fwd = jax.jit(functools.partial(pre_transformer_summary_forward, nhead=nhead))
    tgt, attn = fwd(key_tok, memory, params)
    jax.block_until_ready((tgt, attn))
    assert tgt.shape == (B, S_key, d_model)
    assert attn.shape == (B, S_key, S_mem)
    print("KERNEL_OK")
</pallas_src>

<mosaic_0001>
module attributes {stable_mosaic.version = 11 : i64} {
  func.func @_proj_kernel(%arg0: i32, %arg1: i32, %arg2: memref<16x32xf32, #tpu.memory_space<vmem>>, %arg3: memref<1x32xf32, #tpu.memory_space<vmem>>, %arg4: memref<1x32xf32, #tpu.memory_space<vmem>>, %arg5: memref<32x32xf32, #tpu.memory_space<vmem>>, %arg6: memref<1x32xf32, #tpu.memory_space<vmem>>, %arg7: memref<16x32xf32, #tpu.memory_space<vmem>>, %arg8: memref<16x32xf32, #tpu.memory_space<vmem>>) attributes {dimension_semantics = [#tpu.dimension_semantics<parallel>, #tpu.dimension_semantics<arbitrary>], iteration_bounds = array<i64: 1, 1>, scalar_prefetch = 0 : i64, scratch_operands = 1 : i64, tpu.core_type = #tpu.core_type<tc>, window_params = [{transform_indices = @transform_0, window_bounds = array<i64: 16, 32>}, {pipeline_mode = #tpu.pipeline_mode<synchronous>, transform_indices = @transform_1, window_bounds = array<i64: 1, 32>}, {pipeline_mode = #tpu.pipeline_mode<synchronous>, transform_indices = @transform_2, window_bounds = array<i64: 1, 32>}, {transform_indices = @transform_3, window_bounds = array<i64: 32, 32>}, {transform_indices = @transform_4, window_bounds = array<i64: 1, 32>}, {transform_indices = @transform_5, window_bounds = array<i64: 16, 32>}]} {
    %c0_i32 = arith.constant 0 : i32
    %0 = arith.cmpi eq, %arg1, %c0_i32 : i32
    %1 = arith.extui %0 : i1 to i32
    %c0_i32_0 = arith.constant 0 : i32
    %2 = arith.cmpi ne, %1, %c0_i32_0 : i32
    scf.if %2 {
      %c0_8 = arith.constant 0 : index
      %c0_9 = arith.constant 0 : index
      %10 = vector.load %arg2[%c0_8, %c0_9] : memref<16x32xf32, #tpu.memory_space<vmem>>, vector<16x32xf32>
      %c0_10 = arith.constant 0 : index
      %c0_11 = arith.constant 0 : index
      %11 = vector.load %arg3[%c0_10, %c0_11] : memref<1x32xf32, #tpu.memory_space<vmem>>, vector<1x32xf32>
      %c0_12 = arith.constant 0 : index
      %c0_13 = arith.constant 0 : index
      %12 = vector.load %arg4[%c0_12, %c0_13] : memref<1x32xf32, #tpu.memory_space<vmem>>, vector<1x32xf32>
      %cst_14 = arith.constant dense<0.000000e+00> : vector<16xf32>
      %13 = vector.multi_reduction <add>, %10, %cst_14 [1] : vector<16x32xf32> to vector<16xf32>
      %14 = vector.shape_cast %13 : vector<16xf32> to vector<16x1xf32>
      %cst_15 = arith.constant 3.200000e+01 : f32
      %15 = vector.broadcast %cst_15 : f32 to vector<16x1xf32>
      %16 = arith.divf %14, %15 : vector<16x1xf32>
      %17 = vector.broadcast %16 : vector<16x1xf32> to vector<16x32xf32>
      %18 = arith.subf %10, %17 : vector<16x32xf32>
      %19 = arith.mulf %18, %18 : vector<16x32xf32>
      %cst_16 = arith.constant dense<0.000000e+00> : vector<16xf32>
      %20 = vector.multi_reduction <add>, %19, %cst_16 [1] : vector<16x32xf32> to vector<16xf32>
      %21 = vector.shape_cast %20 : vector<16xf32> to vector<16x1xf32>
      %cst_17 = arith.constant 3.200000e+01 : f32
      %22 = vector.broadcast %cst_17 : f32 to vector<16x1xf32>
      %23 = arith.divf %21, %22 : vector<16x1xf32>
      %24 = vector.broadcast %16 : vector<16x1xf32> to vector<16x32xf32>
      %25 = arith.subf %10, %24 : vector<16x32xf32>
      %cst_18 = arith.constant 9.99999974E-6 : f32
      %26 = vector.broadcast %cst_18 : f32 to vector<16x1xf32>
      %27 = arith.addf %23, %26 : vector<16x1xf32>
      %28 = math.rsqrt %27 : vector<16x1xf32>
      %29 = vector.broadcast %28 : vector<16x1xf32> to vector<16x32xf32>
      %30 = arith.mulf %25, %29 : vector<16x32xf32>
      %31 = vector.broadcast %11 : vector<1x32xf32> to vector<16x32xf32>
      %32 = arith.mulf %30, %31 : vector<16x32xf32>
      %33 = vector.broadcast %12 : vector<1x32xf32> to vector<16x32xf32>
      %34 = arith.addf %32, %33 : vector<16x32xf32>
      %c0_19 = arith.constant 0 : index
      %c0_20 = arith.constant 0 : index
      %35 = vector.load %arg8[%c0_19, %c0_20] : memref<16x32xf32, #tpu.memory_space<vmem>>, vector<16x32xf32>
      tpu.vector_store %arg8[%c0_19, %c0_20], %34 {strides = array<i32>} : memref<16x32xf32, #tpu.memory_space<vmem>>, vector<16x32xf32>,
    } else {
    }
    %c0 = arith.constant 0 : index
    %c0_1 = arith.constant 0 : index
    %3 = vector.load %arg8[%c0, %c0_1] : memref<16x32xf32, #tpu.memory_space<vmem>>, vector<16x32xf32>
    %c0_2 = arith.constant 0 : index
    %c0_3 = arith.constant 0 : index
    %4 = vector.load %arg5[%c0_2, %c0_3] : memref<32x32xf32, #tpu.memory_space<vmem>>, vector<32x32xf32>
    %cst = arith.constant dense<0.000000e+00> : vector<16x32xf32>
    %5 = tpu.matmul %3, %4, %cst {dimension_numbers = #tpu.dot_dimension_numbers<[1], [0], [0], [1], [0, 0, 1, 1], [], []>} : vector<16x32xf32>, vector<32x32xf32>, vector<16x32xf32> -> vector<16x32xf32>
    %c0_4 = arith.constant 0 : index
    %c0_5 = arith.constant 0 : index
    %6 = vector.load %arg6[%c0_4, %c0_5] : memref<1x32xf32, #tpu.memory_space<vmem>>, vector<1x32xf32>
    %7 = vector.broadcast %6 : vector<1x32xf32> to vector<16x32xf32>
    %8 = arith.addf %5, %7 : vector<16x32xf32>
    %c0_6 = arith.constant 0 : index
    %c0_7 = arith.constant 0 : index
    %9 = vector.load %arg7[%c0_6, %c0_7] : memref<16x32xf32, #tpu.memory_space<vmem>>, vector<16x32xf32>
    tpu.vector_store %arg7[%c0_6, %c0_7], %8 {strides = array<i32>} : memref<16x32xf32, #tpu.memory_space<vmem>>, vector<16x32xf32>,
    return
  }
  func.func @transform_0(%arg0: i32, %arg1: i32) -> (i32, i32) {
    %c0_i32 = arith.constant 0 : i32
    %c0_i32_0 = arith.constant 0 : i32
    return %arg0, %c0_i32 : i32, i32
  }
  func.func @transform_1(%arg0: i32, %arg1: i32) -> (i32, i32) {
    %c0_i32 = arith.constant 0 : i32
    %c0_i32_0 = arith.constant 0 : i32
    %c0_i32_1 = arith.constant 0 : i32
    return %c0_i32, %c0_i32_0 : i32, i32
  }
  func.func @transform_2(%arg0: i32, %arg1: i32) -> (i32, i32) {
    %c0_i32 = arith.constant 0 : i32
    %c0_i32_0 = arith.constant 0 : i32
    %c0_i32_1 = arith.constant 0 : i32
    return %c0_i32, %c0_i32_0 : i32, i32
  }
  func.func @transform_3(%arg0: i32, %arg1: i32) -> (i32, i32) {
    %c0_i32 = arith.constant 0 : i32
    %c0_i32_0 = arith.constant 0 : i32
    return %c0_i32, %arg1 : i32, i32
  }
  func.func @transform_4(%arg0: i32, %arg1: i32) -> (i32, i32) {
    %c0_i32 = arith.constant 0 : i32
    %c0_i32_0 = arith.constant 0 : i32
    return %c0_i32, %arg1 : i32, i32
  }
  func.func @transform_5(%arg0: i32, %arg1: i32) -> (i32, i32) {
    %c0_i32 = arith.constant 0 : i32
    return %arg0, %arg1 : i32, i32
  }
}

module attributes {stable_mosaic.version = 11 : i64} {
  func.func @_proj_kernel(%arg0: i32, %arg1: i32, %arg2: memref<32x32xf32, #tpu.memory_space<vmem>>, %arg3: memref<32x64xf32, #tpu.memory_space<vmem>>, %arg4: memref<1x64xf32, #tpu.memory_space<vmem>>, %arg5: memref<32x64xf32, #tpu.memory_space<vmem>>) attributes {dimension_semantics = [#tpu.dimension_semantics<parallel>, #tpu.dimension_semantics<parallel>], iteration_bounds = array<i64: 1, 1>, scalar_prefetch = 0 : i64, scratch_operands = 0 : i64, tpu.core_type = #tpu.core_type<tc>, window_params = [{transform_indices = @transform_0, window_bounds = array<i64: 32, 32>}, {transform_indices = @transform_1, window_bounds = array<i64: 32, 64>}, {transform_indices = @transform_2, window_bounds = array<i64: 1, 64>}, {transform_indices = @transform_3, window_bounds = array<i64: 32, 64>}]} {
    %c0 = arith.constant 0 : index
    %c0_0 = arith.constant 0 : index
    %0 = vector.load %arg2[%c0, %c0_0] : memref<32x32xf32, #tpu.memory_space<vmem>>, vector<32x32xf32>
    %c0_1 = arith.constant 0 : index
    %c0_2 = arith.constant 0 : index
    %1 = vector.load %arg3[%c0_1, %c0_2] : memref<32x64xf32, #tpu.memory_space<vmem>>, vector<32x64xf32>
    %cst = arith.constant dense<0.000000e+00> : vector<32x64xf32>
    %2 = tpu.matmul %0, %1, %cst {dimension_numbers = #tpu.dot_dimension_numbers<[1], [0], [0], [1], [0, 0, 1, 1], [], []>} : vector<32x32xf32>, vector<32x64xf32>, vector<32x64xf32> -> vector<32x64xf32>
    %c0_3 = arith.constant 0 : index
    %c0_4 = arith.constant 0 : index
    %3 = vector.load %arg4[%c0_3, %c0_4] : memref<1x64xf32, #tpu.memory_space<vmem>>, vector<1x64xf32>
    %4 = vector.broadcast %3 : vector<1x64xf32> to vector<32x64xf32>
    %5 = arith.addf %2, %4 : vector<32x64xf32>
    %c0_5 = arith.constant 0 : index
    %c0_6 = arith.constant 0 : index
    %6 = vector.load %arg5[%c0_5, %c0_6] : memref<32x64xf32, #tpu.memory_space<vmem>>, vector<32x64xf32>
    tpu.vector_store %arg5[%c0_5, %c0_6], %5 {strides = array<i32>} : memref<32x64xf32, #tpu.memory_space<vmem>>, vector<32x64xf32>,
    return
  }
  func.func @transform_0(%arg0: i32, %arg1: i32) -> (i32, i32) {
    %c0_i32 = arith.constant 0 : i32
    %c0_i32_0 = arith.constant 0 : i32
    return %arg0, %c0_i32 : i32, i32
  }
  func.func @transform_1(%arg0: i32, %arg1: i32) -> (i32, i32) {
    %c0_i32 = arith.constant 0 : i32
    %c0_i32_0 = arith.constant 0 : i32
    return %c0_i32, %arg1 : i32, i32
  }
  func.func @transform_2(%arg0: i32, %arg1: i32) -> (i32, i32) {
    %c0_i32 = arith.constant 0 : i32
    %c0_i32_0 = arith.constant 0 : i32
    return %c0_i32, %arg1 : i32, i32
  }
  func.func @transform_3(%arg0: i32, %arg1: i32) -> (i32, i32) {
    %c0_i32 = arith.constant 0 : i32
    return %arg0, %arg1 : i32, i32
  }
}

module attributes {stable_mosaic.version = 11 : i64} {
  func.func @_mha_oproj_kernel(%arg0: i32, %arg1: i32, %arg2: memref<1x4x8x8xf32, #tpu.memory_space<vmem>>, %arg3: memref<1x4x8x16xf32, #tpu.memory_space<vmem>>, %arg4: memref<1x4x16x8xf32, #tpu.memory_space<vmem>>, %arg5: memref<4x8x32xf32, #tpu.memory_space<vmem>>, %arg6: memref<1x32xf32, #tpu.memory_space<vmem>>, %arg7: memref<1x8x32xf32, #tpu.memory_space<vmem>>, %arg8: memref<1x8x32xf32, #tpu.memory_space<vmem>>, %arg9: memref<1x8x16xf32, #tpu.memory_space<vmem>>) attributes {dimension_semantics = [#tpu.dimension_semantics<parallel>, #tpu.dimension_semantics<parallel>], iteration_bounds = array<i64: 2, 1>, scalar_prefetch = 0 : i64, scratch_operands = 0 : i64, tpu.core_type = #tpu.core_type<tc>, window_params = [{transform_indices = @transform_0, window_bounds = array<i64: 1, 4, 8, 8>}, {transform_indices = @transform_1, window_bounds = array<i64: 1, 4, 8, 16>}, {transform_indices = @transform_2, window_bounds = array<i64: 1, 4, 16, 8>}, {pipeline_mode = #tpu.pipeline_mode<synchronous>, transform_indices = @transform_3, window_bounds = array<i64: 4, 8, 32>}, {pipeline_mode = #tpu.pipeline_mode<synchronous>, transform_indices = @transform_4, window_bounds = array<i64: 1, 32>}, {transform_indices = @transform_5, window_bounds = array<i64: 1, 8, 32>}, {transform_indices = @transform_6, window_bounds = array<i64: 1, 8, 32>}, {transform_indices = @transform_7, window_bounds = array<i64: 1, 8, 16>}]} {
    %c0 = arith.constant 0 : index
    %c0_0 = arith.constant 0 : index
    %c0_1 = arith.constant 0 : index
    %c0_2 = arith.constant 0 : index
    %0 = vector.load %arg2[%c0, %c0_0, %c0_1, %c0_2] : memref<1x4x8x8xf32, #tpu.memory_space<vmem>>, vector<1x4x8x8xf32>
    %1 = vector.shape_cast %0 : vector<1x4x8x8xf32> to vector<4x8x8xf32>
    %c0_3 = arith.constant 0 : index
    %c0_4 = arith.constant 0 : index
    %c0_5 = arith.constant 0 : index
    %c0_6 = arith.constant 0 : index
    %2 = vector.load %arg3[%c0_3, %c0_4, %c0_5, %c0_6] : memref<1x4x8x16xf32, #tpu.memory_space<vmem>>, vector<1x4x8x16xf32>
    %3 = vector.shape_cast %2 : vector<1x4x8x16xf32> to vector<4x8x16xf32>
    %c0_7 = arith.constant 0 : index
    %c0_8 = arith.constant 0 : index
    %c0_9 = arith.constant 0 : index
    %c0_10 = arith.constant 0 : index
    %4 = vector.load %arg4[%c0_7, %c0_8, %c0_9, %c0_10] : memref<1x4x16x8xf32, #tpu.memory_space<vmem>>, vector<1x4x16x8xf32>
    %5 = vector.shape_cast %4 : vector<1x4x16x8xf32> to vector<4x16x8xf32>
    "tpu.trace_start"() <{level = 10 : i32, message = "hqd,hdk->hqk"}> : () -> ()
    %cst = arith.constant dense<0.000000e+00> : vector<4x8x16xf32>
    %6 = tpu.matmul %1, %3, %cst {dimension_numbers = #tpu.dot_dimension_numbers<[2], [1], [1], [2], [0, 0, 0, 1, 1, 2], [0], [0]>} : vector<4x8x8xf32>, vector<4x8x16xf32>, vector<4x8x16xf32> -> vector<4x8x16xf32>
    "tpu.trace_stop"() : () -> ()
    %cst_11 = arith.constant 0.353553385 : f32
    %7 = vector.broadcast %cst_11 : f32 to vector<4x8x16xf32>
    %8 = arith.mulf %6, %7 : vector<4x8x16xf32>
    %cst_12 = arith.constant dense<0xFF800000> : vector<4x8xf32>
    %9 = vector.multi_reduction <maximumf>, %8, %cst_12 [2] : vector<4x8x16xf32> to vector<4x8xf32>
    %10 = vector.shape_cast %9 : vector<4x8xf32> to vector<4x8x1xf32>
    %11 = vector.broadcast %10 : vector<4x8x1xf32> to vector<4x8x16xf32>
    %12 = arith.subf %8, %11 : vector<4x8x16xf32>
    %13 = math.exp %12 : vector<4x8x16xf32>
    %cst_13 = arith.constant dense<0.000000e+00> : vector<4x8xf32>
    %14 = vector.multi_reduction <add>, %13, %cst_13 [2] : vector<4x8x16xf32> to vector<4x8xf32>
    %15 = vector.shape_cast %14 : vector<4x8xf32> to vector<4x8x1xf32>
    %16 = vector.broadcast %15 : vector<4x8x1xf32> to vector<4x8x16xf32>
    %17 = arith.divf %13, %16 : vector<4x8x16xf32>
    "tpu.trace_start"() <{level = 10 : i32, message = "hqk,hkd->hqd"}> : () -> ()
    %cst_14 = arith.constant dense<0.000000e+00> : vector<4x8x8xf32>
    %18 = tpu.matmul %17, %5, %cst_14 {dimension_numbers = #tpu.dot_dimension_numbers<[2], [1], [1], [2], [0, 0, 0, 1, 1, 2], [0], [0]>} : vector<4x8x16xf32>, vector<4x16x8xf32>, vector<4x8x8xf32> -> vector<4x8x8xf32>
    "tpu.trace_stop"() : () -> ()
    %c0_15 = arith.constant 0 : index
    %c0_16 = arith.constant 0 : index
    %c0_17 = arith.constant 0 : index
    %19 = vector.load %arg5[%c0_15, %c0_16, %c0_17] : memref<4x8x32xf32, #tpu.memory_space<vmem>>, vector<4x8x32xf32>
    "tpu.trace_start"() <{level = 10 : i32, message = "hqd,hdn->hqn"}> : () -> ()
    %cst_18 = arith.constant dense<0.000000e+00> : vector<4x8x32xf32>
    %20 = tpu.matmul %18, %19, %cst_18 {dimension_numbers = #tpu.dot_dimension_numbers<[2], [1], [1], [2], [0, 0, 0, 1, 1, 2], [0], [0]>} : vector<4x8x8xf32>, vector<4x8x32xf32>, vector<4x8x32xf32> -> vector<4x8x32xf32>
    "tpu.trace_stop"() : () -> ()
    %cst_19 = arith.constant dense<0.000000e+00> : vector<8x32xf32>
    %21 = vector.multi_reduction <add>, %20, %cst_19 [0] : vector<4x8x32xf32> to vector<8x32xf32>
    %c0_20 = arith.constant 0 : index
    %c0_21 = arith.constant 0 : index
    %22 = vector.load %arg6[%c0_20, %c0_21] : memref<1x32xf32, #tpu.memory_space<vmem>>, vector<1x32xf32>
    %23 = vector.broadcast %22 : vector<1x32xf32> to vector<8x32xf32>
    %24 = arith.addf %21, %23 : vector<8x32xf32>
    %c0_22 = arith.constant 0 : index
    %c0_23 = arith.constant 0 : index
    %c0_24 = arith.constant 0 : index
    %25 = vector.load %arg7[%c0_22, %c0_23, %c0_24] : memref<1x8x32xf32, #tpu.memory_space<vmem>>, vector<1x8x32xf32>
    %26 = vector.shape_cast %25 : vector<1x8x32xf32> to vector<8x32xf32>
    %27 = arith.addf %24, %26 : vector<8x32xf32>
    %c0_25 = arith.constant 0 : index
    %c0_26 = arith.constant 0 : index
    %c0_27 = arith.constant 0 : index
    %28 = vector.load %arg8[%c0_25, %c0_26, %c0_27] : memref<1x8x32xf32, #tpu.memory_space<vmem>>, vector<1x8x32xf32>
    %29 = vector.shape_cast %28 : vector<1x8x32xf32> to vector<8x32xf32>
    %30 = vector.shape_cast %27 : vector<8x32xf32> to vector<1x8x32xf32>
    tpu.vector_store %arg8[%c0_25, %c0_26, %c0_27], %30 {strides = array<i32>} : memref<1x8x32xf32, #tpu.memory_space<vmem>>, vector<1x8x32xf32>,
    %cst_28 = arith.constant dense<0.000000e+00> : vector<8x16xf32>
    %31 = vector.multi_reduction <add>, %17, %cst_28 [0] : vector<4x8x16xf32> to vector<8x16xf32>
    %cst_29 = arith.constant 4.000000e+00 : f32
    %32 = vector.broadcast %cst_29 : f32 to vector<8x16xf32>
    %33 = arith.divf %31, %32 : vector<8x16xf32>
    %c0_30 = arith.constant 0 : index
    %c0_31 = arith.constant 0 : index
    %c0_32 = arith.constant 0 : index
    %34 = vector.load %arg9[%c0_30, %c0_31, %c0_32] : memref<1x8x16xf32, #tpu.memory_space<vmem>>, vector<1x8x16xf32>
    %35 = vector.shape_cast %34 : vector<1x8x16xf32> to vector<8x16xf32>
    %36 = vector.shape_cast %33 : vector<8x16xf32> to vector<1x8x16xf32>
    tpu.vector_store %arg9[%c0_30, %c0_31, %c0_32], %36 {strides = array<i32>} : memref<1x8x16xf32, #tpu.memory_space<vmem>>, vector<1x8x16xf32>,
    return
  }
  func.func @transform_0(%arg0: i32, %arg1: i32) -> (i32, i32, i32, i32) {
    %c0_i32 = arith.constant 0 : i32
    %c0_i32_0 = arith.constant 0 : i32
    %c0_i32_1 = arith.constant 0 : i32
    return %arg0, %c0_i32, %arg1, %c0_i32_0 : i32, i32, i32, i32
  }
  func.func @transform_1(%arg0: i32, %arg1: i32) -> (i32, i32, i32, i32) {
    %c0_i32 = arith.constant 0 : i32
    %c0_i32_0 = arith.constant 0 : i32
    %c0_i32_1 = arith.constant 0 : i32
    %c0_i32_2 = arith.constant 0 : i32
    return %arg0, %c0_i32, %c0_i32_0, %c0_i32_1 : i32, i32, i32, i32
  }
  func.func @transform_2(%arg0: i32, %arg1: i32) -> (i32, i32, i32, i32) {
    %c0_i32 = arith.constant 0 : i32
    %c0_i32_0 = arith.constant 0 : i32
    %c0_i32_1 = arith.constant 0 : i32
    %c0_i32_2 = arith.constant 0 : i32
    return %arg0, %c0_i32, %c0_i32_0, %c0_i32_1 : i32, i32, i32, i32
  }
  func.func @transform_3(%arg0: i32, %arg1: i32) -> (i32, i32, i32) {
    %c0_i32 = arith.constant 0 : i32
    %c0_i32_0 = arith.constant 0 : i32
    %c0_i32_1 = arith.constant 0 : i32
    %c0_i32_2 = arith.constant 0 : i32
    return %c0_i32, %c0_i32_0, %c0_i32_1 : i32, i32, i32
  }
  func.func @transform_4(%arg0: i32, %arg1: i32) -> (i32, i32) {
    %c0_i32 = arith.constant 0 : i32
    %c0_i32_0 = arith.constant 0 : i32
    %c0_i32_1 = arith.constant 0 : i32
    return %c0_i32, %c0_i32_0 : i32, i32
  }
  func.func @transform_5(%arg0: i32, %arg1: i32) -> (i32, i32, i32) {
    %c0_i32 = arith.constant 0 : i32
    %c0_i32_0 = arith.constant 0 : i32
    return %arg0, %arg1, %c0_i32 : i32, i32, i32
  }
  func.func @transform_6(%arg0: i32, %arg1: i32) -> (i32, i32, i32) {
    %c0_i32 = arith.constant 0 : i32
    %c0_i32_0 = arith.constant 0 : i32
    return %arg0, %arg1, %c0_i32 : i32, i32, i32
  }
  func.func @transform_7(%arg0: i32, %arg1: i32) -> (i32, i32, i32) {
    %c0_i32 = arith.constant 0 : i32
    %c0_i32_0 = arith.constant 0 : i32
    return %arg0, %arg1, %c0_i32 : i32, i32, i32
  }
}

module attributes {stable_mosaic.version = 11 : i64} {
  func.func @_ffn_kernel(%arg0: i32, %arg1: i32, %arg2: memref<16x32xf32, #tpu.memory_space<vmem>>, %arg3: memref<1x32xf32, #tpu.memory_space<vmem>>, %arg4: memref<1x32xf32, #tpu.memory_space<vmem>>, %arg5: memref<32x128xf32, #tpu.memory_space<vmem>>, %arg6: memref<1x128xf32, #tpu.memory_space<vmem>>, %arg7: memref<128x32xf32, #tpu.memory_space<vmem>>, %arg8: memref<1x32xf32, #tpu.memory_space<vmem>>, %arg9: memref<16x32xf32, #tpu.memory_space<vmem>>, %arg10: memref<16x32xf32, #tpu.memory_space<vmem>>, %arg11: memref<16x32xf32, #tpu.memory_space<vmem>>) attributes {dimension_semantics = [#tpu.dimension_semantics<parallel>, #tpu.dimension_semantics<arbitrary>], iteration_bounds = array<i64: 1, 1>, scalar_prefetch = 0 : i64, scratch_operands = 2 : i64, tpu.core_type = #tpu.core_type<tc>, window_params = [{transform_indices = @transform_0, window_bounds = array<i64: 16, 32>}, {pipeline_mode = #tpu.pipeline_mode<synchronous>, transform_indices = @transform_1, window_bounds = array<i64: 1, 32>}, {pipeline_mode = #tpu.pipeline_mode<synchronous>, transform_indices = @transform_2, window_bounds = array<i64: 1, 32>}, {transform_indices = @transform_3, window_bounds = array<i64: 32, 128>}, {transform_indices = @transform_4, window_bounds = array<i64: 1, 128>}, {transform_indices = @transform_5, window_bounds = array<i64: 128, 32>}, {pipeline_mode = #tpu.pipeline_mode<synchronous>, transform_indices = @transform_6, window_bounds = array<i64: 1, 32>}, {transform_indices = @transform_7, window_bounds = array<i64: 16, 32>}]} {
    %c0_i32 = arith.constant 0 : i32
    %0 = arith.cmpi eq, %arg1, %c0_i32 : i32
    %1 = arith.extui %0 : i1 to i32
    %c0_i32_0 = arith.constant 0 : i32
    %2 = arith.cmpi ne, %1, %c0_i32_0 : i32
    scf.if %2 {
      %c0_18 = arith.constant 0 : index
      %c0_19 = arith.constant 0 : index
      %25 = vector.load %arg2[%c0_18, %c0_19] : memref<16x32xf32, #tpu.memory_space<vmem>>, vector<16x32xf32>
      %c0_20 = arith.constant 0 : index
      %c0_21 = arith.constant 0 : index
      %26 = vector.load %arg3[%c0_20, %c0_21] : memref<1x32xf32, #tpu.memory_space<vmem>>, vector<1x32xf32>
      %c0_22 = arith.constant 0 : index
      %c0_23 = arith.constant 0 : index
      %27 = vector.load %arg4[%c0_22, %c0_23] : memref<1x32xf32, #tpu.memory_space<vmem>>, vector<1x32xf32>
      %cst_24 = arith.constant dense<0.000000e+00> : vector<16xf32>
      %28 = vector.multi_reduction <add>, %25, %cst_24 [1] : vector<16x32xf32> to vector<16xf32>
      %29 = vector.shape_cast %28 : vector<16xf32> to vector<16x1xf32>
      %cst_25 = arith.constant 3.200000e+01 : f32
      %30 = vector.broadcast %cst_25 : f32 to vector<16x1xf32>
      %31 = arith.divf %29, %30 : vector<16x1xf32>
      %32 = vector.broadcast %31 : vector<16x1xf32> to vector<16x32xf32>
      %33 = arith.subf %25, %32 : vector<16x32xf32>
      %34 = arith.mulf %33, %33 : vector<16x32xf32>
      %cst_26 = arith.constant dense<0.000000e+00> : vector<16xf32>
      %35 = vector.multi_reduction <add>, %34, %cst_26 [1] : vector<16x32xf32> to vector<16xf32>
      %36 = vector.shape_cast %35 : vector<16xf32> to vector<16x1xf32>
      %cst_27 = arith.constant 3.200000e+01 : f32
      %37 = vector.broadcast %cst_27 : f32 to vector<16x1xf32>
      %38 = arith.divf %36, %37 : vector<16x1xf32>
      %39 = vector.broadcast %31 : vector<16x1xf32> to vector<16x32xf32>
      %40 = arith.subf %25, %39 : vector<16x32xf32>
      %cst_28 = arith.constant 9.99999974E-6 : f32
      %41 = vector.broadcast %cst_28 : f32 to vector<16x1xf32>
      %42 = arith.addf %38, %41 : vector<16x1xf32>
      %43 = math.rsqrt %42 : vector<16x1xf32>
      %44 = vector.broadcast %43 : vector<16x1xf32> to vector<16x32xf32>
      %45 = arith.mulf %40, %44 : vector<16x32xf32>
      %46 = vector.broadcast %26 : vector<1x32xf32> to vector<16x32xf32>
      %47 = arith.mulf %45, %46 : vector<16x32xf32>
      %48 = vector.broadcast %27 : vector<1x32xf32> to vector<16x32xf32>
      %49 = arith.addf %47, %48 : vector<16x32xf32>
      %c0_29 = arith.constant 0 : index
      %c0_30 = arith.constant 0 : index
      %50 = vector.load %arg10[%c0_29, %c0_30] : memref<16x32xf32, #tpu.memory_space<vmem>>, vector<16x32xf32>
      tpu.vector_store %arg10[%c0_29, %c0_30], %49 {strides = array<i32>} : memref<16x32xf32, #tpu.memory_space<vmem>>, vector<16x32xf32>,
      %cst_31 = arith.constant 0.000000e+00 : f32
      %51 = vector.broadcast %cst_31 : f32 to vector<16x32xf32>
      %c0_32 = arith.constant 0 : index
      %c0_33 = arith.constant 0 : index
      %52 = vector.load %arg11[%c0_32, %c0_33] : memref<16x32xf32, #tpu.memory_space<vmem>>, vector<16x32xf32>
      tpu.vector_store %arg11[%c0_32, %c0_33], %51 {strides = array<i32>} : memref<16x32xf32, #tpu.memory_space<vmem>>, vector<16x32xf32>,
    } else {
    }
    %c0 = arith.constant 0 : index
    %c0_1 = arith.constant 0 : index
    %3 = vector.load %arg10[%c0, %c0_1] : memref<16x32xf32, #tpu.memory_space<vmem>>, vector<16x32xf32>
    %c0_2 = arith.constant 0 : index
    %c0_3 = arith.constant 0 : index
    %4 = vector.load %arg5[%c0_2, %c0_3] : memref<32x128xf32, #tpu.memory_space<vmem>>, vector<32x128xf32>
    %cst = arith.constant dense<0.000000e+00> : vector<16x128xf32>
    %5 = tpu.matmul %3, %4, %cst {dimension_numbers = #tpu.dot_dimension_numbers<[1], [0], [0], [1], [0, 0, 1, 1], [], []>} : vector<16x32xf32>, vector<32x128xf32>, vector<16x128xf32> -> vector<16x128xf32>
    %c0_4 = arith.constant 0 : index
    %c0_5 = arith.constant 0 : index
    %6 = vector.load %arg6[%c0_4, %c0_5] : memref<1x128xf32, #tpu.memory_space<vmem>>, vector<1x128xf32>
    %7 = vector.broadcast %6 : vector<1x128xf32> to vector<16x128xf32>
    %8 = arith.addf %5, %7 : vector<16x128xf32>
    %cst_6 = arith.constant 5.000000e-01 : f32
    %9 = vector.broadcast %cst_6 : f32 to vector<16x128xf32>
    %10 = arith.mulf %9, %8 : vector<16x128xf32>
    %cst_7 = arith.constant 0.707106769 : f32
    %11 = vector.broadcast %cst_7 : f32 to vector<16x128xf32>
    %12 = arith.mulf %8, %11 : vector<16x128xf32>
    %13 = math.erf %12 : vector<16x128xf32>
    %cst_8 = arith.constant 1.000000e+00 : f32
    %14 = vector.broadcast %cst_8 : f32 to vector<16x128xf32>
    %15 = arith.addf %14, %13 : vector<16x128xf32>
    %16 = arith.mulf %10, %15 : vector<16x128xf32>
    %c0_9 = arith.constant 0 : index
    %c0_10 = arith.constant 0 : index
    %17 = vector.load %arg11[%c0_9, %c0_10] : memref<16x32xf32, #tpu.memory_space<vmem>>, vector<16x32xf32>
    %c0_11 = arith.constant 0 : index
    %c0_12 = arith.constant 0 : index
    %18 = vector.load %arg7[%c0_11, %c0_12] : memref<128x32xf32, #tpu.memory_space<vmem>>, vector<128x32xf32>
    %cst_13 = arith.constant dense<0.000000e+00> : vector<16x32xf32>
    %19 = tpu.matmul %16, %18, %cst_13 {dimension_numbers = #tpu.dot_dimension_numbers<[1], [0], [0], [1], [0, 0, 1, 1], [], []>} : vector<16x128xf32>, vector<128x32xf32>, vector<16x32xf32> -> vector<16x32xf32>
    %20 = arith.addf %17, %19 : vector<16x32xf32>
    %c0_14 = arith.constant 0 : index
    %c0_15 = arith.constant 0 : index
    %21 = vector.load %arg11[%c0_14, %c0_15] : memref<16x32xf32, #tpu.memory_space<vmem>>, vector<16x32xf32>
    tpu.vector_store %arg11[%c0_14, %c0_15], %20 {strides = array<i32>} : memref<16x32xf32, #tpu.memory_space<vmem>>, vector<16x32xf32>,
    %c0_i32_16 = arith.constant 0 : i32
    %22 = arith.cmpi eq, %arg1, %c0_i32_16 : i32
    %23 = arith.extui %22 : i1 to i32
    %c0_i32_17 = arith.constant 0 : i32
    %24 = arith.cmpi ne, %23, %c0_i32_17 : i32
    scf.if %24 {
      %c0_18 = arith.constant 0 : index
      %c0_19 = arith.constant 0 : index
      %25 = vector.load %arg11[%c0_18, %c0_19] : memref<16x32xf32, #tpu.memory_space<vmem>>, vector<16x32xf32>
      %c0_20 = arith.constant 0 : index
      %c0_21 = arith.constant 0 : index
      %26 = vector.load %arg8[%c0_20, %c0_21] : memref<1x32xf32, #tpu.memory_space<vmem>>, vector<1x32xf32>
      %27 = vector.broadcast %26 : vector<1x32xf32> to vector<16x32xf32>
      %28 = arith.addf %25, %27 : vector<16x32xf32>
      %c0_22 = arith.constant 0 : index
      %c0_23 = arith.constant 0 : index
      %29 = vector.load %arg2[%c0_22, %c0_23] : memref<16x32xf32, #tpu.memory_space<vmem>>, vector<16x32xf32>
      %30 = arith.addf %28, %29 : vector<16x32xf32>
      %c0_24 = arith.constant 0 : index
      %c0_25 = arith.constant 0 : index
      %31 = vector.load %arg9[%c0_24, %c0_25] : memref<16x32xf32, #tpu.memory_space<vmem>>, vector<16x32xf32>
      tpu.vector_store %arg9[%c0_24, %c0_25], %30 {strides = array<i32>} : memref<16x32xf32, #tpu.memory_space<vmem>>, vector<16x32xf32>,
    } else {
    }
    return
  }
  func.func @transform_0(%arg0: i32, %arg1: i32) -> (i32, i32) {
    %c0_i32 = arith.constant 0 : i32
    %c0_i32_0 = arith.constant 0 : i32
    return %arg0, %c0_i32 : i32, i32
  }
  func.func @transform_1(%arg0: i32, %arg1: i32) -> (i32, i32) {
    %c0_i32 = arith.constant 0 : i32
    %c0_i32_0 = arith.constant 0 : i32
    %c0_i32_1 = arith.constant 0 : i32
    return %c0_i32, %c0_i32_0 : i32, i32
  }
  func.func @transform_2(%arg0: i32, %arg1: i32) -> (i32, i32) {
    %c0_i32 = arith.constant 0 : i32
    %c0_i32_0 = arith.constant 0 : i32
    %c0_i32_1 = arith.constant 0 : i32
    return %c0_i32, %c0_i32_0 : i32, i32
  }
  func.func @transform_3(%arg0: i32, %arg1: i32) -> (i32, i32) {
    %c0_i32 = arith.constant 0 : i32
    %c0_i32_0 = arith.constant 0 : i32
    return %c0_i32, %arg1 : i32, i32
  }
  func.func @transform_4(%arg0: i32, %arg1: i32) -> (i32, i32) {
    %c0_i32 = arith.constant 0 : i32
    %c0_i32_0 = arith.constant 0 : i32
    return %c0_i32, %arg1 : i32, i32
  }
  func.func @transform_5(%arg0: i32, %arg1: i32) -> (i32, i32) {
    %c0_i32 = arith.constant 0 : i32
    %c0_i32_0 = arith.constant 0 : i32
    return %arg1, %c0_i32 : i32, i32
  }
  func.func @transform_6(%arg0: i32, %arg1: i32) -> (i32, i32) {
    %c0_i32 = arith.constant 0 : i32
    %c0_i32_0 = arith.constant 0 : i32
    %c0_i32_1 = arith.constant 0 : i32
    return %c0_i32, %c0_i32_0 : i32, i32
  }
  func.func @transform_7(%arg0: i32, %arg1: i32) -> (i32, i32) {
    %c0_i32 = arith.constant 0 : i32
    %c0_i32_0 = arith.constant 0 : i32
    return %arg0, %c0_i32 : i32, i32
  }
}

</mosaic_0001>

<llo_original>
// kernel: pre_transformer_summary_forward.5
$region0: #{pre_transformer_summary_forward.5}
  #allocation0 [shape = 'u32[]', space=smem, size = 0x4, offset = 0x4, fixed_abs, tag = 'smem constant byte address 0x4 - core index']
  #allocation1 [shape = 'u32[144,128]{1,0:T(1,128)}', space=vmem, size = 0x12000, scoped, tag = 'internal scratch']
  %s0 = inlined_call_operand.vmem [shape: f32[32,32], index: 0, kind: input, shape index: {}]
  %s1 = inlined_call_operand.vmem [shape: f32[32,64], index: 1, kind: input, shape index: {}]
  %s2 = inlined_call_operand.vmem [shape: f32[1,64], index: 2, kind: input, shape index: {}]
  %s3 = inlined_call_operand.vmem [shape: f32[32,64], index: 3, kind: output, shape index: {}]
  %s4 = sld [smem:[#allocation0]]
  $region22: #{pre_transformer_summary_forward.5} parent=0
    _
  %s6 = ssub.s32 1, %s4
  %s7 = scalar_select 0, %s6, %s4
  // Predicated region
  $region2: #{pre_transformer_summary_forward.5} parent=0 // pred_check
    _
  $region3: #{pre_transformer_summary_forward.5} parent=0 // pred_check_branch
    %9 = sbr.rel (0) target = $region5
  $region4: #{pre_transformer_summary_forward.5} parent=0 // pred_region
    _
  $region5: #{pre_transformer_summary_forward.5} parent=0 // pred_fallthru
    _
  // Predicated region
  $region6: #{pre_transformer_summary_forward.5} parent=0 // pred_check
    _
  $region7: #{pre_transformer_summary_forward.5} parent=0 // pred_check_branch
    %11 = sbr.rel (0) target = $region9
  $region8: #{pre_transformer_summary_forward.5} parent=0 // pred_region
    _
  $region9: #{pre_transformer_summary_forward.5} parent=0 // pred_fallthru
    _
  // Predicated region
  $region10: #{pre_transformer_summary_forward.5} parent=0 // pred_check
    _
  $region11: #{pre_transformer_summary_forward.5} parent=0 // pred_check_branch
    %13 = sbr.rel (0) target = $region13
  $region12: #{pre_transformer_summary_forward.5} parent=0 // pred_region
    _
  $region13: #{pre_transformer_summary_forward.5} parent=0 // pred_fallthru
    _
  %v14 = vld [vmem:[%s0] sm:$0xff]
  %v15 = vld [vmem:[%s0 + $0x8] sm:$0xff]
  %v16 = vld [vmem:[%s0 + $0x10] sm:$0xff]
  %v17 = vld [vmem:[%s0 + $0x18] sm:$0xff]
  %v18 = vld [vmem:[%s1] sm:$0xff]
  %v19 = vld [vmem:[%s1 + $0x8] sm:$0xff]
  %v20 = vld [vmem:[%s1 + $0x10] sm:$0xff]
  %v21 = vld [vmem:[%s1 + $0x18] sm:$0xff]
  %v22 = vld [vmem:[%s2] sm:$0x1]
  %v24 = vlaneseq
  %v25 = vshrl.u32 %v24, 7
  %v26 = vsub.s32 0, %v25
  %v27 = vrot.slane %v22, %v26
  %vm29 = vcmask 261120
  %v31 = vsel %vm29, %v14, 0
  %v34 = vsel %vm29, %v15, 0
  %v37 = vsel %vm29, %v16, 0
  %v40 = vsel %vm29, %v17, 0
  %42 = vmatprep.subr.mxu0 0.0
  %43 = vmatpush1.msra.mxu0 %v18
  %44 = vmatprep.subr.mxu0 0.0
  %45 = vmatpush1.msra.mxu0 %v19
  %46 = vmatprep.subr.mxu0 0.0
  %47 = vmatpush1.msra.mxu0 %v20
  %48 = vmatprep.subr.mxu0 0.0
  %49 = vmatpush1.msra.mxu0 %v21
  %50 = vmatprep.subr.mxu0 0.0
  %51 = vmatpush1.msra.mxu0 0.0
  %52 = vmatprep.subr.mxu0 0.0
  %53 = vmatpush1.msra.mxu0 0.0
  %54 = vmatprep.subr.mxu0 0.0
  %55 = vmatpush1.msra.mxu0 0.0
  %56 = vmatprep.subr.mxu0 0.0
  %57 = vmatpush1.msra.mxu0 0.0
  %58 = vmatprep.subr.mxu0 0.0
  %59 = vmatpush1.msra.mxu0 0.0
  %60 = vmatprep.subr.mxu0 0.0
  %61 = vmatpush1.msra.mxu0 0.0
  %62 = vmatprep.subr.mxu0 0.0
  %63 = vmatpush1.msra.mxu0 0.0
  %64 = vmatprep.subr.mxu0 0.0
  %65 = vmatpush1.msra.mxu0 0.0
  %66 = vmatprep.subr.mxu0 0.0
  %67 = vmatpush1.msra.mxu0 0.0
  %68 = vmatprep.subr.mxu0 0.0
  %69 = vmatpush1.msra.mxu0 0.0
  %70 = vmatprep.subr.mxu0 0.0
  %71 = vmatpush1.msra.mxu0 0.0
  %72 = vmatprep.subr.mxu0 0.0
  %73 = vmatpush1.msra.mxu0 0.0
  %74 = vmatprep.subr.mxu0 0.0
  %75 = vmatpush1.msra.mxu0 0.0
  %76 = vmatprep.subr.mxu0 0.0
  %77 = vmatpush1.msra.mxu0 0.0
  %78 = vmatprep.subr.mxu0 0.0
  %79 = vmatpush1.msra.mxu0 0.0
  %80 = vmatprep.subr.mxu0 0.0
  %81 = vmatpush1.msra.mxu0 0.0
  %82 = vmatprep.subr.mxu0 0.0
  %83 = vmatpush1.msra.mxu0 0.0
  %84 = vmatprep.subr.mxu0 0.0
  %85 = vmatpush1.msra.mxu0 0.0
  %86 = vmatprep.subr.mxu0 0.0
  %87 = vmatpush1.msra.mxu0 0.0
  %88 = vmatprep.subr.mxu0 0.0
  %89 = vmatpush1.msra.mxu0 0.0
  %90 = vmatprep.subr.mxu0 0.0
  %91 = vmatpush1.msra.mxu0 0.0
  %92 = vmatprep.subr.mxu0 0.0
  %93 = vmatpush1.msra.mxu0 0.0
  %94 = vmatprep.subr.mxu0 0.0
  %95 = vmatpush1.msra.mxu0 0.0
  %96 = vmatprep.subr.mxu0 0.0
  %97 = vmatpush1.msra.mxu0 0.0
  %98 = vmatprep.subr.mxu0 0.0
  %99 = vmatpush1.msra.mxu0 0.0
  %100 = vmatprep.subr.mxu0 0.0
  %101 = vmatpush1.msra.mxu0 0.0
  %102 = vmatprep.subr.mxu0 0.0
  %103 = vmatpush1.msra.mxu0 0.0
  %104 = vmatprep.subr.mxu0 0.0
  %105 = vmatpush1.msra.mxu0 0.0
  %106 = vmatprep.mubr.f32.mxu0 0.0
  %107 = vmatmul.mubr.f32.gmra.mrb[0].mxu0 %v31
  %v108 = vpop.f32.mrb[0].mxu0
  %v109 = vadd.f32 %v27, %v108
  %v110 = vpop.f32.mrb[0].mxu0
  %111 = vmatprep.mubr.f32.mxu0 0.0
  %112 = vmatmul.mubr.f32.gmra.mrb[0].mxu0 %v34
  %v113 = vpop.f32.mrb[0].mxu0
  %v114 = vadd.f32 %v27, %v113
  %v115 = vpop.f32.mrb[0].mxu0
  %116 = vmatprep.mubr.f32.mxu0 0.0
  %117 = vmatmul.mubr.f32.gmra.mrb[0].mxu0 %v37
  %v118 = vpop.f32.mrb[0].mxu0
  %v119 = vadd.f32 %v27, %v118
  %v120 = vpop.f32.mrb[0].mxu0
  %121 = vmatprep.mubr.f32.mxu0 0.0
  %122 = vmatmul.mubr.f32.gmra.mrb[0].mxu0 %v40
  %v123 = vpop.f32.mrb[0].mxu0
  %v124 = vadd.f32 %v27, %v123
  %v125 = vpop.f32.mrb[0].mxu0
  %126 = vdwg.mxu0
  %vm127 = vcmask 523264
  %128 = vst.msk [vmem:[%s3] sm:$0xff] %vm127, %v109
  %129 = vst.msk [vmem:[%s3 + $0x8] sm:$0xff] %vm127, %v114
  %130 = vst.msk [vmem:[%s3 + $0x10] sm:$0xff] %vm127, %v119
  %131 = vst.msk [vmem:[%s3 + $0x18] sm:$0xff] %vm127, %v124
  // Predicated region
  $region14: #{pre_transformer_summary_forward.5} parent=0 // pred_check
    _
  $region15: #{pre_transformer_summary_forward.5} parent=0 // pred_check_branch
    %133 = sbr.rel (0) target = $region17
  $region16: #{pre_transformer_summary_forward.5} parent=0 // pred_region
    _
  $region17: #{pre_transformer_summary_forward.5} parent=0 // pred_fallthru
    _
  // Predicated region
  $region18: #{pre_transformer_summary_forward.5} parent=0 // pred_check
    _
  $region19: #{pre_transformer_summary_forward.5} parent=0 // pred_check_branch
    %135 = sbr.rel (0) target = $region21
  $region20: #{pre_transformer_summary_forward.5} parent=0 // pred_region
    _
  $region21: #{pre_transformer_summary_forward.5} parent=0 // pred_fallthru
    _

// kernel: pre_transformer_summary_forward.4
$region0: #{pre_transformer_summary_forward.4}
  #allocation0 [shape = 'u32[]', space=smem, size = 0x4, offset = 0x4, fixed_abs, tag = 'smem constant byte address 0x4 - core index']
  #allocation1 [shape = 'u32[144,128]{1,0:T(1,128)}', space=vmem, size = 0x12000, scoped, tag = 'internal scratch']
  #allocation2 [shape = 'f32[16,32]{1,0:T(8,128)}', space=vmem, size = 0x2000, scoped, tag = 'scratch operand']
  %s0 = inlined_call_operand.vmem [shape: f32[16,32], index: 0, kind: input, shape index: {}]
  %s1 = inlined_call_operand.vmem [shape: f32[1,32], index: 1, kind: input, shape index: {}]
  %s2 = inlined_call_operand.vmem [shape: f32[1,32], index: 2, kind: input, shape index: {}]
  %s3 = inlined_call_operand.vmem [shape: f32[32,32], index: 3, kind: input, shape index: {}]
  %s4 = inlined_call_operand.vmem [shape: f32[1,32], index: 4, kind: input, shape index: {}]
  %s5 = inlined_call_operand.vmem [shape: f32[16,32], index: 5, kind: output, shape index: {}]
  %s6 = sld [smem:[#allocation0]]
  $region34: #{pre_transformer_summary_forward.4} parent=0
    _
  %s8 = ssub.s32 1, %s6
  %s9 = scalar_select 0, %s8, %s6
  // Predicated region
  $region2: #{pre_transformer_summary_forward.4} parent=0 // pred_check
    _
  $region3: #{pre_transformer_summary_forward.4} parent=0 // pred_check_branch
    %11 = sbr.rel (0) target = $region5
  $region4: #{pre_transformer_summary_forward.4} parent=0 // pred_region
    _
  $region5: #{pre_transformer_summary_forward.4} parent=0 // pred_fallthru
    _
  // Predicated region
  $region6: #{pre_transformer_summary_forward.4} parent=0 // pred_check
    _
  $region7: #{pre_transformer_summary_forward.4} parent=0 // pred_check_branch
    %13 = sbr.rel (0) target = $region9
  $region8: #{pre_transformer_summary_forward.4} parent=0 // pred_region
    _
  $region9: #{pre_transformer_summary_forward.4} parent=0 // pred_fallthru
    _
  // Predicated region
  $region10: #{pre_transformer_summary_forward.4} parent=0 // pred_check
    _
  $region11: #{pre_transformer_summary_forward.4} parent=0 // pred_check_branch
    %15 = sbr.rel (0) target = $region13
  $region12: #{pre_transformer_summary_forward.4} parent=0 // pred_region
    _
  $region13: #{pre_transformer_summary_forward.4} parent=0 // pred_fallthru
    _
  // Predicated region
  $region14: #{pre_transformer_summary_forward.4} parent=0 // pred_check
    _
  $region15: #{pre_transformer_summary_forward.4} parent=0 // pred_check_branch
    %17 = sbr.rel (0) target = $region17
  $region16: #{pre_transformer_summary_forward.4} parent=0 // pred_region
    _
  $region17: #{pre_transformer_summary_forward.4} parent=0 // pred_fallthru
    _
  // Predicated region
  $region18: #{pre_transformer_summary_forward.4} parent=0 // pred_check
    _
  $region19: #{pre_transformer_summary_forward.4} parent=0 // pred_check_branch
    %19 = sbr.rel (0) target = $region21
  $region20: #{pre_transformer_summary_forward.4} parent=0 // pred_region
    _
  $region21: #{pre_transformer_summary_forward.4} parent=0 // pred_fallthru
    _
  %p20 = scmp.eq.s32.totalorder 0, 0
  // Predicated region
  $region22: #{pre_transformer_summary_forward.4} parent=0 // pred_check
    %p21 = pneg %p20
  $region23: #{pre_transformer_summary_forward.4} parent=0 // pred_check_branch
    %23 = sbr.rel (%p21) target = $region25
  $region24: #{pre_transformer_summary_forward.4} parent=0 // pred_region
    %v24 = vld [vmem:[%s0] sm:$0xff]
    %v25 = vld [vmem:[%s0 + $0x8] sm:$0xff]
    %v26 = vld [vmem:[%s1] sm:$0x1]
    %v27 = vld [vmem:[%s2] sm:$0x1]
    %vm28 = vcmask 261120
    %v29 = vsel %vm28, %v24, 0.0
    %30 = vadd.xlane.f32.xlu0 %v29
    %v31 = vpop.xlane.xlu0 %30
    %v32 = vsel %vm28, %v25, 0.0
    %33 = vadd.xlane.f32.xlu0 %v32
    %v34 = vpop.xlane.xlu0 %33
    %v35 = vrcp.pop 32.0
    %v36 = vmul.f32 %v31, %v35
    %v37 = vmul.f32 %v34, %v35
    %v38 = vsub.f32 %v24, %v36
    %v39 = vsub.f32 %v25, %v37
    %v40 = vmul.f32 %v38, %v38
    %v41 = vmul.f32 %v39, %v39
    %v42 = vsel %vm28, %v40, 0.0
    %43 = vadd.xlane.f32.xlu0 %v42
    %v44 = vpop.xlane.xlu0 %43
    %v45 = vsel %vm28, %v41, 0.0
    %46 = vadd.xlane.f32.xlu0 %v45
    %v47 = vpop.xlane.xlu0 %46
    %v48 = vmul.f32 %v44, %v35
    %v49 = vmul.f32 %v47, %v35
    %v50 = vadd.f32 %v48, 1e-05
    %v51 = vadd.f32 %v49, 1e-05
    %v52 = vrsqrt.pop %v50
    %v53 = vrsqrt.pop %v51
    %v54 = vmul.f32 %v38, %v52
    %v55 = vmul.f32 %v39, %v53
    %v57 = vlaneseq
    %v58 = vshrl.u32 %v57, 7
    %v59 = vsub.s32 0, %v58
    %v60 = vrot.slane %v26, %v59
    %v62 = vmul.f32 %v54, %v60
    %v63 = vmul.f32 %v55, %v60
    %v65 = vlaneseq
    %v66 = vshrl.u32 %v65, 7
    %v67 = vsub.s32 0, %v66
    %v68 = vrot.slane %v27, %v67
    %v70 = vadd.f32 %v62, %v68
    %v71 = vadd.f32 %v63, %v68
    %72 = vst.msk [vmem:[#allocation2] sm:$0xff] %vm28, %v70
    %73 = vst.msk [vmem:[#allocation2 + $0x8] sm:$0xff] %vm28, %v71
  $region25: #{pre_transformer_summary_forward.4} parent=0 // pred_fallthru
    _
  %v74 = vld [vmem:[#allocation2] sm:$0xff]
  %v75 = vld [vmem:[#allocation2 + $0x8] sm:$0xff]
  %v76 = vld [vmem:[%s3] sm:$0xff]
  %v77 = vld [vmem:[%s3 + $0x8] sm:$0xff]
  %v78 = vld [vmem:[%s3 + $0x10] sm:$0xff]
  %v79 = vld [vmem:[%s3 + $0x18] sm:$0xff]
  %v80 = vld [vmem:[%s4] sm:$0x1]
  %v82 = vlaneseq
  %v83 = vshrl.u32 %v82, 7
  %v84 = vsub.s32 0, %v83
  %v85 = vrot.slane %v80, %v84
  %vm87 = vcmask 261120
  %v89 = vsel %vm87, %v74, 0
  %v92 = vsel %vm87, %v75, 0
  %94 = vmatprep.subr.mxu0 0.0
  %95 = vmatpush1.msra.mxu0 %v76
  %96 = vmatprep.subr.mxu0 0.0
  %97 = vmatpush1.msra.mxu0 %v77
  %98 = vmatprep.subr.mxu0 0.0
  %99 = vmatpush1.msra.mxu0 %v78
  %100 = vmatprep.subr.mxu0 0.0
  %101 = vmatpush1.msra.mxu0 %v79
  %102 = vmatprep.subr.mxu0 0.0
  %103 = vmatpush1.msra.mxu0 0.0
  %104 = vmatprep.subr.mxu0 0.0
  %105 = vmatpush1.msra.mxu0 0.0
  %106 = vmatprep.subr.mxu0 0.0
  %107 = vmatpush1.msra.mxu0 0.0
  %108 = vmatprep.subr.mxu0 0.0
  %109 = vmatpush1.msra.mxu0 0.0
  %110 = vmatprep.subr.mxu0 0.0
  %111 = vmatpush1.msra.mxu0 0.0
  %112 = vmatprep.subr.mxu0 0.0
  %113 = vmatpush1.msra.mxu0 0.0
  %114 = vmatprep.subr.mxu0 0.0
  %115 = vmatpush1.msra.mxu0 0.0
  %116 = vmatprep.subr.mxu0 0.0
  %117 = vmatpush1.msra.mxu0 0.0
  %118 = vmatprep.subr.mxu0 0.0
  %119 = vmatpush1.msra.mxu0 0.0
  %120 = vmatprep.subr.mxu0 0.0
  %121 = vmatpush1.msra.mxu0 0.0
  %122 = vmatprep.subr.mxu0 0.0
  %123 = vmatpush1.msra.mxu0 0.0
  %124 = vmatprep.subr.mxu0 0.0
  %125 = vmatpush1.msra.mxu0 0.0
  %126 = vmatprep.subr.mxu0 0.0
  %127 = vmatpush1.msra.mxu0 0.0
  %128 = vmatprep.subr.mxu0 0.0
  %129 = vmatpush1.msra.mxu0 0.0
  %130 = vmatprep.subr.mxu0 0.0
  %131 = vmatpush1.msra.mxu0 0.0
  %132 = vmatprep.subr.mxu0 0.0
  %133 = vmatpush1.msra.mxu0 0.0
  %134 = vmatprep.subr.mxu0 0.0
  %135 = vmatpush1.msra.mxu0 0.0
  %136 = vmatprep.subr.mxu0 0.0
  %137 = vmatpush1.msra.mxu0 0.0
  %138 = vmatprep.subr.mxu0 0.0
  %139 = vmatpush1.msra.mxu0 0.0
  %140 = vmatprep.subr.mxu0 0.0
  %141 = vmatpush1.msra.mxu0 0.0
  %142 = vmatprep.subr.mxu0 0.0
  %143 = vmatpush1.msra.mxu0 0.0
  %144 = vmatprep.subr.mxu0 0.0
  %145 = vmatpush1.msra.mxu0 0.0
  %146 = vmatprep.subr.mxu0 0.0
  %147 = vmatpush1.msra.mxu0 0.0
  %148 = vmatprep.subr.mxu0 0.0
  %149 = vmatpush1.msra.mxu0 0.0
  %150 = vmatprep.subr.mxu0 0.0
  %151 = vmatpush1.msra.mxu0 0.0
  %152 = vmatprep.subr.mxu0 0.0
  %153 = vmatpush1.msra.mxu0 0.0
  %154 = vmatprep.subr.mxu0 0.0
  %155 = vmatpush1.msra.mxu0 0.0
  %156 = vmatprep.subr.mxu0 0.0
  %157 = vmatpush1.msra.mxu0 0.0
  %158 = vmatprep.mubr.f32.mxu0 0.0
  %159 = vmatmul.mubr.f32.gmra.mrb[0].mxu0 %v89
  %v160 = vpop.f32.mrb[0].mxu0
  %v161 = vadd.f32 %v85, %v160
  %v162 = vpop.f32.mrb[0].mxu0
  %163 = vmatprep.mubr.f32.mxu0 0.0
  %164 = vmatmul.mubr.f32.gmra.mrb[0].mxu0 %v92
  %v165 = vpop.f32.mrb[0].mxu0
  %v166 = vadd.f32 %v85, %v165
  %v167 = vpop.f32.mrb[0].mxu0
  %168 = vdwg.mxu0
  %169 = vst.msk [vmem:[%s5] sm:$0xff] %vm87, %v161
  %170 = vst.msk [vmem:[%s5 + $0x8] sm:$0xff] %vm87, %v166
  // Predicated region
  $region26: #{pre_transformer_summary_forward.4} parent=0 // pred_check
    _
  $region27: #{pre_transformer_summary_forward.4} parent=0 // pred_check_branch
    %172 = sbr.rel (0) target = $region29
  $region28: #{pre_transformer_summary_forward.4} parent=0 // pred_region
    _
  $region29: #{pre_transformer_summary_forward.4} parent=0 // pred_fallthru
    _
  // Predicated region
  $region30: #{pre_transformer_summary_forward.4} parent=0 // pred_check
    _
  $region31: #{pre_transformer_summary_forward.4} parent=0 // pred_check_branch
    %174 = sbr.rel (0) target = $region33
  $region32: #{pre_transformer_summary_forward.4} parent=0 // pred_region
    _
  $region33: #{pre_transformer_summary_forward.4} parent=0 // pred_fallthru
    _

// kernel: pre_transformer_summary_forward.7
$region0: #{pre_transformer_summary_forward.7}
  #allocation0 [shape = 'u32[]', space=smem, size = 0x4, offset = 0x4, fixed_abs, tag = 'smem constant byte address 0x4 - core index']
  #allocation1 [shape = 'u32[144,128]{1,0:T(1,128)}', space=vmem, size = 0x12000, scoped, tag = 'internal scratch']
  #allocation2 [shape = 'f32[16,32]{1,0:T(8,128)}', space=vmem, size = 0x2000, scoped, tag = 'scratch operand']
  #allocation3 [shape = 'f32[16,32]{1,0:T(8,128)}', space=vmem, size = 0x2000, scoped, tag = 'scratch operand']
  %s0 = inlined_call_operand.vmem [shape: f32[16,32], index: 0, kind: input, shape index: {}]
  %s1 = inlined_call_operand.vmem [shape: f32[1,32], index: 1, kind: input, shape index: {}]
  %s2 = inlined_call_operand.vmem [shape: f32[1,32], index: 2, kind: input, shape index: {}]
  %s3 = inlined_call_operand.vmem [shape: f32[32,128], index: 3, kind: input, shape index: {}]
  %s4 = inlined_call_operand.vmem [shape: f32[1,128], index: 4, kind: input, shape index: {}]
  %s5 = inlined_call_operand.vmem [shape: f32[128,32], index: 5, kind: input, shape index: {}]
  %s6 = inlined_call_operand.vmem [shape: f32[1,32], index: 6, kind: input, shape index: {}]
  %s7 = inlined_call_operand.hbm [shape: f32[16,32], index: 7, kind: output, shape index: {}]
  %s8 = sld [smem:[#allocation0]]
  $region46: #{pre_transformer_summary_forward.7} parent=0
    _
  %s10 = ssub.s32 1, %s8
  %s11 = scalar_select 0, %s10, %s8
  $region1: #{pre_transformer_summary_forward.7} parent=0
    #allocation4 [shape = 'u8[8192]{0}', space=vmem, size = 0x2000, scoped, tag = 'output window, operand 0, single buffered']
    #allocation5 [shape = 's32[1]{0}', space=sflag, size = 0x4, scoped, tag = 'scoped memory for pre_transformer_summary_forward.7']
    %12 = vsyncpa [#allocation5], 0
    // Predicated region
    $region2: #{pre_transformer_summary_forward.7} parent=1 // pred_check
      _
    $region3: #{pre_transformer_summary_forward.7} parent=1 // pred_check_branch
      %14 = sbr.rel (0) target = $region5
    $region4: #{pre_transformer_summary_forward.7} parent=1 // pred_region
      _
    $region5: #{pre_transformer_summary_forward.7} parent=1 // pred_fallthru
      _
    // Predicated region
    $region6: #{pre_transformer_summary_forward.7} parent=1 // pred_check
      _
    $region7: #{pre_transformer_summary_forward.7} parent=1 // pred_check_branch
      %16 = sbr.rel (0) target = $region9
    $region8: #{pre_transformer_summary_forward.7} parent=1 // pred_region
      _
    $region9: #{pre_transformer_summary_forward.7} parent=1 // pred_fallthru
      _
    // Predicated region
    $region10: #{pre_transformer_summary_forward.7} parent=1 // pred_check
      _
    $region11: #{pre_transformer_summary_forward.7} parent=1 // pred_check_branch
      %18 = sbr.rel (0) target = $region13
    $region12: #{pre_transformer_summary_forward.7} parent=1 // pred_region
      _
    $region13: #{pre_transformer_summary_forward.7} parent=1 // pred_fallthru
      _
    // Predicated region
    $region14: #{pre_transformer_summary_forward.7} parent=1 // pred_check
      _
    $region15: #{pre_transformer_summary_forward.7} parent=1 // pred_check_branch
      %20 = sbr.rel (0) target = $region17
    $region16: #{pre_transformer_summary_forward.7} parent=1 // pred_region
      _
    $region17: #{pre_transformer_summary_forward.7} parent=1 // pred_fallthru
      _
    // Predicated region
    $region18: #{pre_transformer_summary_forward.7} parent=1 // pred_check
      _
    $region19: #{pre_transformer_summary_forward.7} parent=1 // pred_check_branch
      %22 = sbr.rel (0) target = $region21
    $region20: #{pre_transformer_summary_forward.7} parent=1 // pred_region
      _
    $region21: #{pre_transformer_summary_forward.7} parent=1 // pred_fallthru
      _
    // Predicated region
    $region22: #{pre_transformer_summary_forward.7} parent=1 // pred_check
      _
    $region23: #{pre_transformer_summary_forward.7} parent=1 // pred_check_branch
      %24 = sbr.rel (0) target = $region25
    $region24: #{pre_transformer_summary_forward.7} parent=1 // pred_region
      _
    $region25: #{pre_transformer_summary_forward.7} parent=1 // pred_fallthru
      _
    // Predicated region
    $region26: #{pre_transformer_summary_forward.7} parent=1 // pred_check
      _
    $region27: #{pre_transformer_summary_forward.7} parent=1 // pred_check_branch
      %26 = sbr.rel (0) target = $region29
    $region28: #{pre_transformer_summary_forward.7} parent=1 // pred_region
      _
    $region29: #{pre_transformer_summary_forward.7} parent=1 // pred_fallthru
      _
    %p27 = scmp.eq.s32.totalorder 0, 0
    // Predicated region
    $region30: #{pre_transformer_summary_forward.7} parent=1 // pred_check
      %p28 = pneg %p27
    $region31: #{pre_transformer_summary_forward.7} parent=1 // pred_check_branch
      %30 = sbr.rel (%p28) target = $region33
    $region32: #{pre_transformer_summary_forward.7} parent=1 // pred_region
      %v31 = vld [vmem:[%s0] sm:$0xff]
      %v32 = vld [vmem:[%s0 + $0x8] sm:$0xff]
      %v33 = vld [vmem:[%s1] sm:$0x1]
      %v34 = vld [vmem:[%s2] sm:$0x1]
      %vm35 = vcmask 261120
      %v36 = vsel %vm35, %v31, 0.0
      %37 = vadd.xlane.f32.xlu0 %v36
      %v38 = vpop.xlane.xlu0 %37
      %v39 = vsel %vm35, %v32, 0.0
      %40 = vadd.xlane.f32.xlu0 %v39
      %v41 = vpop.xlane.xlu0 %40
      %v42 = vrcp.pop 32.0
      %v43 = vmul.f32 %v38, %v42
      %v44 = vmul.f32 %v41, %v42
      %v45 = vsub.f32 %v31, %v43
      %v46 = vsub.f32 %v32, %v44
      %v47 = vmul.f32 %v45, %v45
      %v48 = vmul.f32 %v46, %v46
      %v49 = vsel %vm35, %v47, 0.0
      %50 = vadd.xlane.f32.xlu0 %v49
      %v51 = vpop.xlane.xlu0 %50
      %v52 = vsel %vm35, %v48, 0.0
      %53 = vadd.xlane.f32.xlu0 %v52
      %v54 = vpop.xlane.xlu0 %53
      %v55 = vmul.f32 %v51, %v42
      %v56 = vmul.f32 %v54, %v42
      %v57 = vadd.f32 %v55, 1e-05
      %v58 = vadd.f32 %v56, 1e-05
      %v59 = vrsqrt.pop %v57
      %v60 = vrsqrt.pop %v58
      %v61 = vmul.f32 %v45, %v59
      %v62 = vmul.f32 %v46, %v60
      %v64 = vlaneseq
      %v65 = vshrl.u32 %v64, 7
      %v66 = vsub.s32 0, %v65
      %v67 = vrot.slane %v33, %v66
      %v69 = vmul.f32 %v61, %v67
      %v70 = vmul.f32 %v62, %v67
      %v72 = vlaneseq
      %v73 = vshrl.u32 %v72, 7
      %v74 = vsub.s32 0, %v73
      %v75 = vrot.slane %v34, %v74
      %v77 = vadd.f32 %v69, %v75
      %v78 = vadd.f32 %v70, %v75
      %79 = vst.msk [vmem:[#allocation2] sm:$0xff] %vm35, %v77
      %80 = vst.msk [vmem:[#allocation2 + $0x8] sm:$0xff] %vm35, %v78
      %81 = vst.msk [vmem:[#allocation3] sm:$0xff] %vm35, 0.0
      %82 = vst.msk [vmem:[#allocation3 + $0x8] sm:$0xff] %vm35, 0.0
    $region33: #{pre_transformer_summary_forward.7} parent=1 // pred_fallthru
      _
    %v83 = vld [vmem:[#allocation2] sm:$0xff]
    %v84 = vld [vmem:[#allocation2 + $0x8] sm:$0xff]
    %v85 = vld [vmem:[%s3] sm:$0xff]
    %v86 = vld [vmem:[%s3 + $0x8] sm:$0xff]
    %v87 = vld [vmem:[%s3 + $0x10] sm:$0xff]
    %v88 = vld [vmem:[%s3 + $0x18] sm:$0xff]
    %v89 = vld [vmem:[%s4] sm:$0x1]
    %v91 = vlaneseq
    %v92 = vshrl.u32 %v91, 7
    %v93 = vsub.s32 0, %v92
    %v94 = vrot.slane %v89, %v93
    %vm96 = vcmask 261120
    %v98 = vsel %vm96, %v83, 0
    %v101 = vsel %vm96, %v84, 0
    %103 = vmatprep.subr.mxu0 0.0
    %104 = vmatpush1.msra.mxu0 %v85
    %105 = vmatprep.subr.mxu0 0.0
    %106 = vmatpush1.msra.mxu0 %v86
    %107 = vmatprep.subr.mxu0 0.0
    %108 = vmatpush1.msra.mxu0 %v87
    %109 = vmatprep.subr.mxu0 0.0
    %110 = vmatpush1.msra.mxu0 %v88
    %111 = vmatprep.subr.mxu0 0.0
    %112 = vmatpush1.msra.mxu0 0.0
    %113 = vmatprep.subr.mxu0 0.0
    %114 = vmatpush1.msra.mxu0 0.0
    %115 = vmatprep.subr.mxu0 0.0
    %116 = vmatpush1.msra.mxu0 0.0
    %117 = vmatprep.subr.mxu0 0.0
    %118 = vmatpush1.msra.mxu0 0.0
    %119 = vmatprep.subr.mxu0 0.0
    %120 = vmatpush1.msra.mxu0 0.0
    %121 = vmatprep.subr.mxu0 0.0
    %122 = vmatpush1.msra.mxu0 0.0
    %123 = vmatprep.subr.mxu0 0.0
    %124 = vmatpush1.msra.mxu0 0.0
    %125 = vmatprep.subr.mxu0 0.0
    %126 = vmatpush1.msra.mxu0 0.0
    %127 = vmatprep.subr.mxu0 0.0
    %128 = vmatpush1.msra.mxu0 0.0
    %129 = vmatprep.subr.mxu0 0.0
    %130 = vmatpush1.msra.mxu0 0.0
    %131 = vmatprep.subr.mxu0 0.0
    %132 = vmatpush1.msra.mxu0 0.0
    %133 = vmatprep.subr.mxu0 0.0
    %134 = vmatpush1.msra.mxu0 0.0
    %135 = vmatprep.subr.mxu0 0.0
    %136 = vmatpush1.msra.mxu0 0.0
    %137 = vmatprep.subr.mxu0 0.0
    %138 = vmatpush1.msra.mxu0 0.0
    %139 = vmatprep.subr.mxu0 0.0
    %140 = vmatpush1.msra.mxu0 0.0
    %141 = vmatprep.subr.mxu0 0.0
    %142 = vmatpush1.msra.mxu0 0.0
    %143 = vmatprep.subr.mxu0 0.0
    %144 = vmatpush1.msra.mxu0 0.0
    %145 = vmatprep.subr.mxu0 0.0
    %146 = vmatpush1.msra.mxu0 0.0
    %147 = vmatprep.subr.mxu0 0.0
    %148 = vmatpush1.msra.mxu0 0.0
    %149 = vmatprep.subr.mxu0 0.0
    %150 = vmatpush1.msra.mxu0 0.0
    %151 = vmatprep.subr.mxu0 0.0
    %152 = vmatpush1.msra.mxu0 0.0
    %153 = vmatprep.subr.mxu0 0.0
    %154 = vmatpush1.msra.mxu0 0.0
    %155 = vmatprep.subr.mxu0 0.0
    %156 = vmatpush1.msra.mxu0 0.0
    %157 = vmatprep.subr.mxu0 0.0
    %158 = vmatpush1.msra.mxu0 0.0
    %159 = vmatprep.subr.mxu0 0.0
    %160 = vmatpush1.msra.mxu0 0.0
    %161 = vmatprep.subr.mxu0 0.0
    %162 = vmatpush1.msra.mxu0 0.0
    %163 = vmatprep.subr.mxu0 0.0
    %164 = vmatpush1.msra.mxu0 0.0
    %165 = vmatprep.subr.mxu0 0.0
    %166 = vmatpush1.msra.mxu0 0.0
    %167 = vmatprep.mubr.f32.mxu0 0.0
    %168 = vmatmul.mubr.f32.gmra.mrb[0].mxu0 %v98
    %v169 = vpop.f32.mrb[0].mxu0
    %v170 = vadd.f32 %v94, %v169
    %v171 = vpop.f32.mrb[0].mxu0
    %172 = vmatprep.mubr.f32.mxu0 0.0
    %173 = vmatmul.mubr.f32.gmra.mrb[0].mxu0 %v101
    %v174 = vpop.f32.mrb[0].mxu0
    %v175 = vadd.f32 %v94, %v174
    %v176 = vpop.f32.mrb[0].mxu0
    %177 = vdwg.mxu0
    %v178 = vmul.f32 %v170, 0.5
    %v179 = vmul.f32 %v175, 0.5
    %v180 = vmul.f32 %v170, 0.70710677
    %v181 = vmul.f32 %v175, 0.70710677
    %v182 = verf.f32.pop %v180
    %v183 = verf.f32.pop %v181
    %v184 = vadd.f32 %v182, 1.0
    %v185 = vadd.f32 %v183, 1.0
    %v186 = vmul.f32 %v178, %v184
    %v187 = vmul.f32 %v179, %v185
    %v188 = vld [vmem:[#allocation3] sm:$0xff]
    %v189 = vld [vmem:[#allocation3 + $0x8] sm:$0xff]
    %v190 = vld [vmem:[%s5] sm:$0xff]
    %v191 = vld [vmem:[%s5 + $0x8] sm:$0xff]
    %v192 = vld [vmem:[%s5 + $0x10] sm:$0xff]
    %v193 = vld [vmem:[%s5 + $0x18] sm:$0xff]
    %v194 = vld [vmem:[%s5 + $0x20] sm:$0xff]
    %v195 = vld [vmem:[%s5 + $0x28] sm:$0xff]
    %v196 = vld [vmem:[%s5 + $0x30] sm:$0xff]
    %v197 = vld [vmem:[%s5 + $0x38] sm:$0xff]
    %v198 = vld [vmem:[%s5 + $0x40] sm:$0xff]
    %v199 = vld [vmem:[%s5 + $0x48] sm:$0xff]
    %v200 = vld [vmem:[%s5 + $0x50] sm:$0xff]
    %v201 = vld [vmem:[%s5 + $0x58] sm:$0xff]
    %v202 = vld [vmem:[%s5 + $0x60] sm:$0xff]
    %v203 = vld [vmem:[%s5 + $0x68] sm:$0xff]
    %v204 = vld [vmem:[%s5 + $0x70] sm:$0xff]
    %v205 = vld [vmem:[%s5 + $0x78] sm:$0xff]
    %206 = vmatprep.subr.mxu0 0.0
    %207 = vmatpush1.msra.mxu0 %v190
    %208 = vmatprep.subr.mxu0 0.0
    %209 = vmatpush1.msra.mxu0 %v191
    %210 = vmatprep.subr.mxu0 0.0
    %211 = vmatpush1.msra.mxu0 %v192
    %212 = vmatprep.subr.mxu0 0.0
    %213 = vmatpush1.msra.mxu0 %v193
    %214 = vmatprep.subr.mxu0 0.0
    %215 = vmatpush1.msra.mxu0 %v194
    %216 = vmatprep.subr.mxu0 0.0
    %217 = vmatpush1.msra.mxu0 %v195
    %218 = vmatprep.subr.mxu0 0.0
    %219 = vmatpush1.msra.mxu0 %v196
    %220 = vmatprep.subr.mxu0 0.0
    %221 = vmatpush1.msra.mxu0 %v197
    %222 = vmatprep.subr.mxu0 0.0
    %223 = vmatpush1.msra.mxu0 %v198
    %224 = vmatprep.subr.mxu0 0.0
    %225 = vmatpush1.msra.mxu0 %v199
    %226 = vmatprep.subr.mxu0 0.0
    %227 = vmatpush1.msra.mxu0 %v200
    %228 = vmatprep.subr.mxu0 0.0
    %229 = vmatpush1.msra.mxu0 %v201
    %230 = vmatprep.subr.mxu0 0.0
    %231 = vmatpush1.msra.mxu0 %v202
    %232 = vmatprep.subr.mxu0 0.0
    %233 = vmatpush1.msra.mxu0 %v203
    %234 = vmatprep.subr.mxu0 0.0
    %235 = vmatpush1.msra.mxu0 %v204
    %236 = vmatprep.subr.mxu0 0.0
    %237 = vmatpush1.msra.mxu0 %v205
    %238 = vmatprep.subr.mxu0 0.0
    %239 = vmatpush1.msra.mxu0 0.0
    %240 = vmatprep.subr.mxu0 0.0
    %241 = vmatpush1.msra.mxu0 0.0
    %242 = vmatprep.subr.mxu0 0.0
    %243 = vmatpush1.msra.mxu0 0.0
    %244 = vmatprep.subr.mxu0 0.0
    %245 = vmatpush1.msra.mxu0 0.0
    %246 = vmatprep.subr.mxu0 0.0
    %247 = vmatpush1.msra.mxu0 0.0
    %248 = vmatprep.subr.mxu0 0.0
    %249 = vmatpush1.msra.mxu0 0.0
    %250 = vmatprep.subr.mxu0 0.0
    %251 = vmatpush1.msra.mxu0 0.0
    %252 = vmatprep.subr.mxu0 0.0
    %253 = vmatpush1.msra.mxu0 0.0
    %254 = vmatprep.subr.mxu0 0.0
    %255 = vmatpush1.msra.mxu0 0.0
    %256 = vmatprep.subr.mxu0 0.0
    %257 = vmatpush1.msra.mxu0 0.0
    %258 = vmatprep.subr.mxu0 0.0
    %259 = vmatpush1.msra.mxu0 0.0
    %260 = vmatprep.subr.mxu0 0.0
    %261 = vmatpush1.msra.mxu0 0.0
    %262 = vmatprep.subr.mxu0 0.0
    %263 = vmatpush1.msra.mxu0 0.0
    %264 = vmatprep.subr.mxu0 0.0
    %265 = vmatpush1.msra.mxu0 0.0
    %266 = vmatprep.subr.mxu0 0.0
    %267 = vmatpush1.msra.mxu0 0.0
    %268 = vmatprep.subr.mxu0 0.0
    %269 = vmatpush1.msra.mxu0 0.0
    %270 = vmatprep.mubr.f32.mxu0 0.0
    %271 = vmatmul.mubr.f32.gmra.mrb[0].mxu0 %v186
    %v272 = vpop.f32.mrb[0].mxu0
    %v273 = vadd.f32 0.0, %v272
    %v274 = vpop.f32.mrb[0].mxu0
    %275 = vmatprep.mubr.f32.mxu0 0.0
    %276 = vmatmul.mubr.f32.gmra.mrb[0].mxu0 %v187
    %v277 = vpop.f32.mrb[0].mxu0
    %v278 = vadd.f32 0.0, %v277
    %v279 = vpop.f32.mrb[0].mxu0
    %280 = vdwg.mxu0
    %v281 = vadd.f32 %v188, %v273
    %v282 = vadd.f32 %v189, %v278
    %283 = vst.msk [vmem:[#allocation3] sm:$0xff] %vm96, %v281
    %284 = vst.msk [vmem:[#allocation3 + $0x8] sm:$0xff] %vm96, %v282
    // Predicated region
    $region34: #{pre_transformer_summary_forward.7} parent=1 // pred_check
      %p285 = pneg %p27
    $region35: #{pre_transformer_summary_forward.7} parent=1 // pred_check_branch
      %287 = sbr.rel (%p285) target = $region37
    $region36: #{pre_transformer_summary_forward.7} parent=1 // pred_region
      %v288 = vld [vmem:[#allocation3] sm:$0xff]
      %v289 = vld [vmem:[#allocation3 + $0x8] sm:$0xff]
      %v290 = vld [vmem:[%s6] sm:$0x1]
      %v292 = vlaneseq
      %v293 = vshrl.u32 %v292, 7
      %v294 = vsub.s32 0, %v293
      %v295 = vrot.slane %v290, %v294
      %v297 = vadd.f32 %v288, %v295
      %v298 = vadd.f32 %v289, %v295
      %v299 = vld [vmem:[%s0] sm:$0xff]
      %v300 = vld [vmem:[%s0 + $0x8] sm:$0xff]
      %v301 = vadd.f32 %v297, %v299
      %v302 = vadd.f32 %v298, %v300
      %303 = vst.msk [vmem:[#allocation4] sm:$0xff] %vm96, %v301
      %304 = vst.msk [vmem:[#allocation4 + $0x8] sm:$0xff] %vm96, %v302
    $region37: #{pre_transformer_summary_forward.7} parent=1 // pred_fallthru
      _
    // Predicated region
    $region38: #{pre_transformer_summary_forward.7} parent=1 // pred_check
      _
    $region39: #{pre_transformer_summary_forward.7} parent=1 // pred_check_branch
      %306 = sbr.rel (0) target = $region41
    $region40: #{pre_transformer_summary_forward.7} parent=1 // pred_region
      %s308 = ssub.s32 256, 256
      %309 = vsyncadd [#allocation5], %s308
      %s310 = sshll.u32 [#allocation4], 4
      %s311 = int_to_ptr.vmem [resolvable:$true] %s310
      %316 = dma.vmem_to_hbm [thread:$0]  %s311, 256, %s7, [#allocation5], 128, 128, 8
    $region41: #{pre_transformer_summary_forward.7} parent=1 // pred_fallthru
      _
    // Predicated region
    $region42: #{pre_transformer_summary_forward.7} parent=1 // pred_check
      _
    $region43: #{pre_transformer_summary_forward.7} parent=1 // pred_check_branch
      %318 = sbr.rel (0) target = $region45
    $region44: #{pre_transformer_summary_forward.7} parent=1 // pred_region
      %319 = dma.done [#allocation5], 256
    $region45: #{pre_transformer_summary_forward.7} parent=1 // pred_fallthru
      _
    %320 = vsyncpa [#allocation5], 1

// kernel: pre_transformer_summary_forward.6
$region0: #{pre_transformer_summary_forward.6}
  #allocation0 [shape = 'u32[]', space=smem, size = 0x4, offset = 0x4, fixed_abs, tag = 'smem constant byte address 0x4 - core index']
  #allocation1 [shape = 'u32[144,128]{1,0:T(1,128)}', space=vmem, size = 0x12000, scoped, tag = 'internal scratch']
  %s0 = inlined_call_operand.vmem [shape: f32[2,4,8,8], index: 0, kind: input, shape index: {}]
  %s1 = inlined_call_operand.vmem [shape: f32[2,4,8,16], index: 1, kind: input, shape index: {}]
  %s2 = inlined_call_operand.vmem [shape: f32[2,4,16,8], index: 2, kind: input, shape index: {}]
  %s3 = inlined_call_operand.vmem [shape: f32[4,8,32], index: 3, kind: input, shape index: {}]
  %s4 = inlined_call_operand.vmem [shape: f32[1,32], index: 4, kind: input, shape index: {}]
  %s5 = inlined_call_operand.vmem [shape: f32[2,8,32], index: 5, kind: input, shape index: {}]
  %s6 = inlined_call_operand.vmem [shape: f32[2,8,32], index: 6, kind: output, shape index: {0}]
  %s7 = inlined_call_operand.hbm [shape: f32[2,8,16], index: 7, kind: output, shape index: {1}]
  %8 = xla_tuple %s6, %s7
  %s9 = sld [smem:[#allocation0]]
  $region65: #{pre_transformer_summary_forward.6} parent=0
    _
  %s11 = ssub.s32 1, %s9
  %s12 = scalar_select 0, %s11, %s9
  $region1: #{pre_transformer_summary_forward.6} parent=0
    #allocation2 [shape = 'u8[8192]{0}', space=vmem, size = 0x2000, scoped, tag = 'output window, operand 1']
    #allocation3 [shape = 's32[2]{0}', space=sflag, size = 0x8, scoped, tag = 'scoped memory for pre_transformer_summary_forward.6']
    %13 = vsyncpa [#allocation3], 0
    %s14 = scalar_lea.sflag [#allocation3], 1
    %15 = vsyncpa %s14, 0
    loop: start=0, step=1, limit=4
    $region2: #{pre_transformer_summary_forward.6} parent=1 // loop_pre_header
      _
    $region3: #{pre_transformer_summary_forward.6} parent=1 // loop_header
      %s17 = sphi 0, %s21
      %p18 = scmp.ge.s32.totalorder %s17, 4
      %s24 = sphi 0, %s36
      %s25 = sphi 0, %s32
      %s26 = sphi 0, %s24
      %s27 = sphi 0, %s25
      %s28 = sphi 0, %s26
      %s29 = sphi 0, %s27
      %s41 = sphi 0, %s43
      %s44 = sphi 0, %s41
      %s45 = sphi 0, %s44
      %s61 = sphi 0, %s45
      %s67 = sphi 0, %s69
      %s70 = sphi 0, %s67
      %s71 = sphi 0, %s70
      %s87 = sphi 0, %s71
      %s93 = sphi 0, %s95
      %s96 = sphi 0, %s93
      %s97 = sphi 0, %s96
      %s113 = sphi 0, %s97
      %s117 = sphi 0, %s117
      %s119 = sphi 0, %s117
      %s120 = sphi 0, %s119
      %s134 = sphi 0, %s120
      %s138 = sphi 0, %s138
      %s140 = sphi 0, %s138
      %s141 = sphi 0, %s140
      %s155 = sphi 0, %s141
      %s163 = sphi 0, %s165
      %s166 = sphi 0, %s163
      %s167 = sphi 0, %s166
      %s183 = sphi 0, %s167
      %s191 = sphi 0, %s193
      %s194 = sphi 0, %s191
      %s195 = sphi 0, %s194
      %s211 = sphi 0, %s195
      %s219 = sphi 0, %s221
      %s222 = sphi 0, %s219
      %s223 = sphi 0, %s222
      %s239 = sphi 0, %s223
    $region4: #{pre_transformer_summary_forward.6} parent=1 // loop_header_branch
      %20 = sbr.rel (%p18) target = $region8
    $region5: #{pre_transformer_summary_forward.6} parent=1 // loop_body
      %s22 = ssub.s32 %s17, 1
      %s23 = ssub.s32 %s17, 2
      %s30 = sadd.s32 1, %s25
      %p31 = scmp.ge.s32.totalorder %s30, 1
      %s32 = scalar_select %p31, 0, %s30
      %s33 = sadd.s32 1, %s24
      %s34 = scalar_select %p31, %s33, %s24
      %p35 = scmp.ge.s32.totalorder %s34, 2
      %s36 = scalar_select %p35, 0, %s34
      %s37 = ssub.s32 %s24, %s36
      %s38 = ssub.s32 %s25, %s32
      %s39 = sor.u32 %s37, %s38
      %p40 = scmp.eq.s32.totalorder %s39, 0
      %s42 = sadd.s32 %s41, 1
      %s43 = scalar_select %p40, %s41, %s42
      %p46 = pneg %p40
      %p47 = scmp.eq.s32.totalorder %s17, 1
      %p48 = por %p46, %p47
      %p49 = scmp.ne.s32.totalorder %s41, %s44
      %p50 = scmp.eq.s32.totalorder %s17, 0
      %p51 = por %p49, %p50
      %p52 = scmp.ne.s32.totalorder %s41, %s44
      %p53 = scmp.eq.s32.totalorder %s22, 1
      %p54 = por %p52, %p53
      %p55 = scmp.ne.s32.totalorder %s44, %s45
      %p56 = scmp.eq.s32.totalorder %s22, 0
      %p57 = por %p55, %p56
      %p58 = scmp.ne.s32.totalorder %s44, %s45
      %p59 = scmp.eq.s32.totalorder %s23, 1
      %p60 = por %p58, %p59
      %p62 = scmp.ne.s32.totalorder %s45, %s61
      %p63 = scmp.eq.s32.totalorder %s23, 0
      %p64 = por %p62, %p63
      %s65 = ssub.s32 %s24, %s36
      %p66 = scmp.eq.s32.totalorder %s65, 0
      %s68 = sadd.s32 %s67, 1
      %s69 = scalar_select %p66, %s67, %s68
      %p72 = pneg %p66
      %p73 = scmp.eq.s32.totalorder %s17, 1
      %p74 = por %p72, %p73
      %p75 = scmp.ne.s32.totalorder %s67, %s70
      %p76 = scmp.eq.s32.totalorder %s17, 0
      %p77 = por %p75, %p76
      %p78 = scmp.ne.s32.totalorder %s67, %s70
      %p79 = scmp.eq.s32.totalorder %s22, 1
      %p80 = por %p78, %p79
      %p81 = scmp.ne.s32.totalorder %s70, %s71
      %p82 = scmp.eq.s32.totalorder %s22, 0
      %p83 = por %p81, %p82
      %p84 = scmp.ne.s32.totalorder %s70, %s71
      %p85 = scmp.eq.s32.totalorder %s23, 1
      %p86 = por %p84, %p85
      %p88 = scmp.ne.s32.totalorder %s71, %s87
      %p89 = scmp.eq.s32.totalorder %s23, 0
      %p90 = por %p88, %p89
      %s91 = ssub.s32 %s24, %s36
      %p92 = scmp.eq.s32.totalorder %s91, 0
      %s94 = sadd.s32 %s93, 1
      %s95 = scalar_select %p92, %s93, %s94
      %p98 = pneg %p92
      %p99 = scmp.eq.s32.totalorder %s17, 1
      %p100 = por %p98, %p99
      %p101 = scmp.ne.s32.totalorder %s93, %s96
      %p102 = scmp.eq.s32.totalorder %s17, 0
      %p103 = por %p101, %p102
      %p104 = scmp.ne.s32.totalorder %s93, %s96
      %p105 = scmp.eq.s32.totalorder %s22, 1
      %p106 = por %p104, %p105
      %p107 = scmp.ne.s32.totalorder %s96, %s97
      %p108 = scmp.eq.s32.totalorder %s22, 0
      %p109 = por %p107, %p108
      %p110 = scmp.ne.s32.totalorder %s96, %s97
      %p111 = scmp.eq.s32.totalorder %s23, 1
      %p112 = por %p110, %p111
      %p114 = scmp.ne.s32.totalorder %s97, %s113
      %p115 = scmp.eq.s32.totalorder %s23, 0
      %p116 = por %p114, %p115
      %s118 = sadd.s32 %s117, 1
      %p121 = scmp.eq.s32.totalorder %s17, 1
      %p122 = scmp.ne.s32.totalorder %s117, %s119
      %p123 = scmp.eq.s32.totalorder %s17, 0
      %p124 = por %p122, %p123
      %p125 = scmp.ne.s32.totalorder %s117, %s119
      %p126 = scmp.eq.s32.totalorder %s22, 1
      %p127 = por %p125, %p126
      %p128 = scmp.ne.s32.totalorder %s119, %s120
      %p129 = scmp.eq.s32.totalorder %s22, 0
      %p130 = por %p128, %p129
      %p131 = scmp.ne.s32.totalorder %s119, %s120
      %p132 = scmp.eq.s32.totalorder %s23, 1
      %p133 = por %p131, %p132
      %p135 = scmp.ne.s32.totalorder %s120, %s134
      %p136 = scmp.eq.s32.totalorder %s23, 0
      %p137 = por %p135, %p136
      %s139 = sadd.s32 %s138, 1
      %p142 = scmp.eq.s32.totalorder %s17, 1
      %p143 = scmp.ne.s32.totalorder %s138, %s140
      %p144 = scmp.eq.s32.totalorder %s17, 0
      %p145 = por %p143, %p144
      %p146 = scmp.ne.s32.totalorder %s138, %s140
      %p147 = scmp.eq.s32.totalorder %s22, 1
      %p148 = por %p146, %p147
      %p149 = scmp.ne.s32.totalorder %s140, %s141
      %p150 = scmp.eq.s32.totalorder %s22, 0
      %p151 = por %p149, %p150
      %p152 = scmp.ne.s32.totalorder %s140, %s141
      %p153 = scmp.eq.s32.totalorder %s23, 1
      %p154 = por %p152, %p153
      %p156 = scmp.ne.s32.totalorder %s141, %s155
      %p157 = scmp.eq.s32.totalorder %s23, 0
      %p158 = por %p156, %p157
      %s159 = ssub.s32 %s24, %s36
      %s160 = ssub.s32 %s25, %s32
      %s161 = sor.u32 %s159, %s160
      %p162 = scmp.eq.s32.totalorder %s161, 0
      %s164 = sadd.s32 %s163, 1
      %s165 = scalar_select %p162, %s163, %s164
      %p168 = pneg %p162
      %p169 = scmp.eq.s32.totalorder %s17, 1
      %p170 = por %p168, %p169
      %p171 = scmp.ne.s32.totalorder %s163, %s166
      %p172 = scmp.eq.s32.totalorder %s17, 0
      %p173 = por %p171, %p172
      %p174 = scmp.ne.s32.totalorder %s163, %s166
      %p175 = scmp.eq.s32.totalorder %s22, 1
      %p176 = por %p174, %p175
      %p177 = scmp.ne.s32.totalorder %s166, %s167
      %p178 = scmp.eq.s32.totalorder %s22, 0
      %p179 = por %p177, %p178
      %p180 = scmp.ne.s32.totalorder %s166, %s167
      %p181 = scmp.eq.s32.totalorder %s23, 1
      %p182 = por %p180, %p181
      %p184 = scmp.ne.s32.totalorder %s167, %s183
      %p185 = scmp.eq.s32.totalorder %s23, 0
      %p186 = por %p184, %p185
      %s187 = ssub.s32 %s24, %s36
      %s188 = ssub.s32 %s25, %s32
      %s189 = sor.u32 %s187, %s188
      %p190 = scmp.eq.s32.totalorder %s189, 0
      %s192 = sadd.s32 %s191, 1
      %s193 = scalar_select %p190, %s191, %s192
      %p196 = pneg %p190
      %p197 = scmp.eq.s32.totalorder %s17, 1
      %p198 = por %p196, %p197
      %p199 = scmp.ne.s32.totalorder %s191, %s194
      %p200 = scmp.eq.s32.totalorder %s17, 0
      %p201 = por %p199, %p200
      %p202 = scmp.ne.s32.totalorder %s191, %s194
      %p203 = scmp.eq.s32.totalorder %s22, 1
      %p204 = por %p202, %p203
      %p205 = scmp.ne.s32.totalorder %s194, %s195
      %p206 = scmp.eq.s32.totalorder %s22, 0
      %p207 = por %p205, %p206
      %p208 = scmp.ne.s32.totalorder %s194, %s195
      %p209 = scmp.eq.s32.totalorder %s23, 1
      %p210 = por %p208, %p209
      %p212 = scmp.ne.s32.totalorder %s195, %s211
      %p213 = scmp.eq.s32.totalorder %s23, 0
      %p214 = por %p212, %p213
      %s215 = ssub.s32 %s24, %s36
      %s216 = ssub.s32 %s25, %s32
      %s217 = sor.u32 %s215, %s216
      %p218 = scmp.eq.s32.totalorder %s217, 0
      %s220 = sadd.s32 %s219, 1
      %s221 = scalar_select %p218, %s219, %s220
      %p224 = pneg %p218
      %p225 = scmp.eq.s32.totalorder %s17, 1
      %p226 = por %p224, %p225
      %p227 = scmp.ne.s32.totalorder %s219, %s222
      %p228 = scmp.eq.s32.totalorder %s17, 0
      %p229 = por %p227, %p228
      %p230 = scmp.ne.s32.totalorder %s219, %s222
      %p231 = scmp.eq.s32.totalorder %s22, 1
      %p232 = por %p230, %p231
      %p233 = scmp.ne.s32.totalorder %s222, %s223
      %p234 = scmp.eq.s32.totalorder %s22, 0
      %p235 = por %p233, %p234
      %p236 = scmp.ne.s32.totalorder %s222, %s223
      %p237 = scmp.eq.s32.totalorder %s23, 1
      %p238 = por %p236, %p237
      %p240 = scmp.ne.s32.totalorder %s223, %s239
      %p241 = scmp.eq.s32.totalorder %s23, 0
      %p242 = por %p240, %p241
      %p243 = scmp.le.s32.totalorder 1, %s17
      %p244 = scmp.lt.s32.totalorder %s17, 3
      %p245 = pnand %p243, %p244
      %p246 = pneg %p245
      // Predicated region
      $region9: #{pre_transformer_summary_forward.6} parent=5 // pred_check
        _
      $region10: #{pre_transformer_summary_forward.6} parent=5 // pred_check_branch
        %248 = sbr.rel (%p245) target = $region12
      $region11: #{pre_transformer_summary_forward.6} parent=5 // pred_region
        %s249 = ssub.s32 %s17, 1
        // Predicated region
        $region13: #{pre_transformer_summary_forward.6} parent=11 // pred_check
          %p250 = pneg %p130
        $region14: #{pre_transformer_summary_forward.6} parent=11 // pred_check_branch
          %252 = sbr.rel (%p250) target = $region16
        $region15: #{pre_transformer_summary_forward.6} parent=11 // pred_region
          _
        $region16: #{pre_transformer_summary_forward.6} parent=11 // pred_fallthru
          _
        // Predicated region
        $region17: #{pre_transformer_summary_forward.6} parent=11 // pred_check
          %p253 = pneg %p151
        $region18: #{pre_transformer_summary_forward.6} parent=11 // pred_check_branch
          %255 = sbr.rel (%p253) target = $region20
        $region19: #{pre_transformer_summary_forward.6} parent=11 // pred_region
          _
        $region20: #{pre_transformer_summary_forward.6} parent=11 // pred_fallthru
          _
      $region12: #{pre_transformer_summary_forward.6} parent=5 // pred_fallthru
        _
      %p256 = scmp.lt.s32.totalorder %s17, 2
      // Predicated region
      $region21: #{pre_transformer_summary_forward.6} parent=5 // pred_check
        %p257 = pneg %p256
      $region22: #{pre_transformer_summary_forward.6} parent=5 // pred_check_branch
        %259 = sbr.rel (%p257) target = $region24
      $region23: #{pre_transformer_summary_forward.6} parent=5 // pred_region
        // Predicated region
        $region25: #{pre_transformer_summary_forward.6} parent=23 // pred_check
          %p260 = pneg %p51
        $region26: #{pre_transformer_summary_forward.6} parent=23 // pred_check_branch
          %262 = sbr.rel (%p260) target = $region28
        $region27: #{pre_transformer_summary_forward.6} parent=23 // pred_region
          %p263 = scmp.lt.s32.totalorder %s24, 1
          %s264 = scalar_select %p263, %s24, 1
          %p265 = scmp.lt.s32.totalorder %s25, 0
          %s266 = scalar_select %p265, %s25, 0
          %s267 = smul.addr %s264, 4
          %s268 = sadd.s32 %s266, %s267
          %s269 = smul.addr %s268, 8
          %s270 = scalar_lea.vmem %s0, %s269
        $region28: #{pre_transformer_summary_forward.6} parent=23 // pred_fallthru
          _
        // Predicated region
        $region29: #{pre_transformer_summary_forward.6} parent=23 // pred_check
          %p271 = pneg %p77
        $region30: #{pre_transformer_summary_forward.6} parent=23 // pred_check_branch
          %273 = sbr.rel (%p271) target = $region32
        $region31: #{pre_transformer_summary_forward.6} parent=23 // pred_region
          %p274 = scmp.lt.s32.totalorder %s24, 1
          %s275 = scalar_select %p274, %s24, 1
          %s276 = smul.addr %s275, 4
          %s277 = smul.addr %s276, 8
          %s278 = scalar_lea.vmem %s1, %s277
        $region32: #{pre_transformer_summary_forward.6} parent=23 // pred_fallthru
          _
        // Predicated region
        $region33: #{pre_transformer_summary_forward.6} parent=23 // pred_check
          %p279 = pneg %p103
        $region34: #{pre_transformer_summary_forward.6} parent=23 // pred_check_branch
          %281 = sbr.rel (%p279) target = $region36
        $region35: #{pre_transformer_summary_forward.6} parent=23 // pred_region
          %p282 = scmp.lt.s32.totalorder %s24, 1
          %s283 = scalar_select %p282, %s24, 1
          %s284 = smul.addr %s283, 8
          %s285 = smul.addr %s284, 8
          %s286 = scalar_lea.vmem %s2, %s285
        $region36: #{pre_transformer_summary_forward.6} parent=23 // pred_fallthru
          _
        // Predicated region
        $region37: #{pre_transformer_summary_forward.6} parent=23 // pred_check
          %p287 = pneg %p173
        $region38: #{pre_transformer_summary_forward.6} parent=23 // pred_check_branch
          %289 = sbr.rel (%p287) target = $region40
        $region39: #{pre_transformer_summary_forward.6} parent=23 // pred_region
          %p290 = scmp.lt.s32.totalorder %s24, 1
          %s291 = scalar_select %p290, %s24, 1
          %p292 = scmp.lt.s32.totalorder %s25, 0
          %s293 = scalar_select %p292, %s25, 0
          %s294 = sadd.s32 %s293, %s291
          %s295 = smul.addr %s294, 8
          %s296 = scalar_lea.vmem %s5, %s295
        $region40: #{pre_transformer_summary_forward.6} parent=23 // pred_fallthru
          _
      $region24: #{pre_transformer_summary_forward.6} parent=5 // pred_fallthru
        _
      %p297 = scmp.le.s32.totalorder 1, %s17
      %p298 = scmp.lt.s32.totalorder %s17, 3
      %p299 = pnand %p297, %p298
      %p300 = pneg %p299
      // Predicated region
      $region41: #{pre_transformer_summary_forward.6} parent=5 // pred_check
        _
      $region42: #{pre_transformer_summary_forward.6} parent=5 // pred_check_branch
        %302 = sbr.rel (%p299) target = $region44
      $region43: #{pre_transformer_summary_forward.6} parent=5 // pred_region
        %s303 = ssub.s32 %s17, 1
        %p304 = scmp.lt.s32.totalorder %s26, 1
        %s305 = scalar_select %p304, %s26, 1
        %p306 = scmp.lt.s32.totalorder %s27, 0
        %s307 = scalar_select %p306, %s27, 0
        %s308 = smul.addr %s305, 4
        %s309 = sadd.s32 %s307, %s308
        %s310 = smul.addr %s309, 8
        %s311 = scalar_lea.vmem %s0, %s310
        %p312 = pneg %p57
        %p313 = pneg %p54
        %p314 = scmp.lt.s32.totalorder %s26, 1
        %s315 = scalar_select %p314, %s26, 1
        %s316 = smul.addr %s315, 4
        %s317 = smul.addr %s316, 8
        %s318 = scalar_lea.vmem %s1, %s317
        %p319 = pneg %p83
        %p320 = pneg %p80
        %p321 = scmp.lt.s32.totalorder %s26, 1
        %s322 = scalar_select %p321, %s26, 1
        %s323 = smul.addr %s322, 8
        %s324 = smul.addr %s323, 8
        %s325 = scalar_lea.vmem %s2, %s324
        %p326 = pneg %p109
        %p327 = pneg %p106
        %p328 = pneg %p130
        %p329 = pneg %p127
        %p330 = pneg %p151
        %p331 = pneg %p148
        %p332 = scmp.lt.s32.totalorder %s26, 1
        %s333 = scalar_select %p332, %s26, 1
        %p334 = scmp.lt.s32.totalorder %s27, 0
        %s335 = scalar_select %p334, %s27, 0
        %s336 = sadd.s32 %s335, %s333
        %s337 = smul.addr %s336, 8
        %s338 = scalar_lea.vmem %s5, %s337
        %p339 = pneg %p179
        %p340 = pneg %p176
        %p341 = pneg %p207
        %p342 = pneg %p204
        %p343 = scmp.lt.s32.totalorder %s26, 1
        %s344 = scalar_select %p343, %s26, 1
        %p345 = scmp.lt.s32.totalorder %s27, 0
        %s346 = scalar_select %p345, %s27, 0
        %s347 = sadd.s32 %s346, %s344
        %s348 = smul.addr %s347, 8
        %s349 = scalar_lea.vmem %s6, %s348
        %p350 = pneg %p235
        %p351 = pneg %p232
        %s352 = sand.u32 %s222, 1
        %s353 = scalar_lea.sflag [#allocation3], %s352
        %s354 = sand.u32 %s222, 1
        %s355 = smul.addr %s354, 8
        %s356 = scalar_lea.vmem [#allocation2], %s355
        %p357 = scmp.lt.s32.totalorder %s26, 1
        %s358 = scalar_select %p357, %s26, 1
        %p359 = scmp.lt.s32.totalorder %s27, 0
        %s360 = scalar_select %p359, %s27, 0
        %s361 = smul.addr %s358, 4
        %s362 = sadd.s32 %s360, %s361
        %s363 = smul.addr %s362, 8
        %s364 = scalar_lea.vmem %s0, %s363
        %p365 = scmp.lt.s32.totalorder %s26, 1
        %s366 = scalar_select %p365, %s26, 1
        %s367 = smul.addr %s366, 4
        %s368 = smul.addr %s367, 8
        %s369 = scalar_lea.vmem %s1, %s368
        %p370 = scmp.lt.s32.totalorder %s26, 1
        %s371 = scalar_select %p370, %s26, 1
        %s372 = smul.addr %s371, 8
        %s373 = smul.addr %s372, 8
        %s374 = scalar_lea.vmem %s2, %s373
        %p375 = scmp.lt.s32.totalorder %s26, 1
        %s376 = scalar_select %p375, %s26, 1
        %p377 = scmp.lt.s32.totalorder %s27, 0
        %s378 = scalar_select %p377, %s27, 0
        %s379 = sadd.s32 %s378, %s376
        %s380 = smul.addr %s379, 8
        %s381 = scalar_lea.vmem %s5, %s380
        %p382 = scmp.lt.s32.totalorder %s26, 1
        %s383 = scalar_select %p382, %s26, 1
        %p384 = scmp.lt.s32.totalorder %s27, 0
        %s385 = scalar_select %p384, %s27, 0
        %s386 = sadd.s32 %s385, %s383
        %s387 = smul.addr %s386, 8
        %s388 = scalar_lea.vmem %s6, %s387
        %v389 = vld [vmem:[%s364] sm:$0xff]
        %v390 = vld [vmem:[%s364 + $0x8] sm:$0xff]
        %v391 = vld [vmem:[%s364 + $0x10] sm:$0xff]
        %v392 = vld [vmem:[%s364 + $0x18] sm:$0xff]
        %v393 = vld [vmem:[%s369] sm:$0xff]
        %v394 = vld [vmem:[%s369 + $0x8] sm:$0xff]
        %v395 = vld [vmem:[%s369 + $0x10] sm:$0xff]
        %v396 = vld [vmem:[%s369 + $0x18] sm:$0xff]
        %v397 = vld [vmem:[%s374] sm:$0xff]
        %v398 = vld [vmem:[%s374 + $0x8] sm:$0xff]
        %v399 = vld [vmem:[%s374 + $0x10] sm:$0xff]
        %v400 = vld [vmem:[%s374 + $0x18] sm:$0xff]
        %v401 = vld [vmem:[%s374 + $0x20] sm:$0xff]
        %v402 = vld [vmem:[%s374 + $0x28] sm:$0xff]
        %v403 = vld [vmem:[%s374 + $0x30] sm:$0xff]
        %v404 = vld [vmem:[%s374 + $0x38] sm:$0xff]
        %vm405 = vcmask 64512
        %v407 = vsel %vm405, %v389, 0
        %409 = vmatprep.subr.mxu0 0.0
        %410 = vmatpush1.msra.mxu0 %v393
        %411 = vmatprep.subr.mxu0 0.0
        %412 = vmatpush1.msra.mxu0 0.0
        %413 = vmatprep.subr.mxu0 0.0
        %414 = vmatpush1.msra.mxu0 0.0
        %415 = vmatprep.subr.mxu0 0.0
        %416 = vmatpush1.msra.mxu0 0.0
        %417 = vmatprep.subr.mxu0 0.0
        %418 = vmatpush1.msra.mxu0 0.0
        %419 = vmatprep.subr.mxu0 0.0
        %420 = vmatpush1.msra.mxu0 0.0
        %421 = vmatprep.subr.mxu0 0.0
        %422 = vmatpush1.msra.mxu0 0.0
        %423 = vmatprep.subr.mxu0 0.0
        %424 = vmatpush1.msra.mxu0 0.0
        %425 = vmatprep.subr.mxu0 0.0
        %426 = vmatpush1.msra.mxu0 0.0
        %427 = vmatprep.subr.mxu0 0.0
        %428 = vmatpush1.msra.mxu0 0.0
        %429 = vmatprep.subr.mxu0 0.0
        %430 = vmatpush1.msra.mxu0 0.0
        %431 = vmatprep.subr.mxu0 0.0
        %432 = vmatpush1.msra.mxu0 0.0
        %433 = vmatprep.subr.mxu0 0.0
        %434 = vmatpush1.msra.mxu0 0.0
        %435 = vmatprep.subr.mxu0 0.0
        %436 = vmatpush1.msra.mxu0 0.0
        %437 = vmatprep.subr.mxu0 0.0
        %438 = vmatpush1.msra.mxu0 0.0
        %439 = vmatprep.subr.mxu0 0.0
        %440 = vmatpush1.msra.mxu0 0.0
        %441 = vmatprep.subr.mxu0 0.0
        %442 = vmatpush1.msra.mxu0 0.0
        %443 = vmatprep.subr.mxu0 0.0
        %444 = vmatpush1.msra.mxu0 0.0
        %445 = vmatprep.subr.mxu0 0.0
        %446 = vmatpush1.msra.mxu0 0.0
        %447 = vmatprep.subr.mxu0 0.0
        %448 = vmatpush1.msra.mxu0 0.0
        %449 = vmatprep.subr.mxu0 0.0
        %450 = vmatpush1.msra.mxu0 0.0
        %451 = vmatprep.subr.mxu0 0.0
        %452 = vmatpush1.msra.mxu0 0.0
        %453 = vmatprep.subr.mxu0 0.0
        %454 = vmatpush1.msra.mxu0 0.0
        %455 = vmatprep.subr.mxu0 0.0
        %456 = vmatpush1.msra.mxu0 0.0
        %457 = vmatprep.subr.mxu0 0.0
        %458 = vmatpush1.msra.mxu0 0.0
        %459 = vmatprep.subr.mxu0 0.0
        %460 = vmatpush1.msra.mxu0 0.0
        %461 = vmatprep.subr.mxu0 0.0
        %462 = vmatpush1.msra.mxu0 0.0
        %463 = vmatprep.subr.mxu0 0.0
        %464 = vmatpush1.msra.mxu0 0.0
        %465 = vmatprep.subr.mxu0 0.0
        %466 = vmatpush1.msra.mxu0 0.0
        %467 = vmatprep.subr.mxu0 0.0
        %468 = vmatpush1.msra.mxu0 0.0
        %469 = vmatprep.subr.mxu0 0.0
        %470 = vmatpush1.msra.mxu0 0.0
        %471 = vmatprep.subr.mxu0 0.0
        %472 = vmatpush1.msra.mxu0 0.0
        %473 = vmatprep.mubr.f32.mxu0 0.0
        %474 = vmatmul.mubr.f32.gmra.mrb[0].mxu0 %v407
        %v475 = vpop.f32.mrb[0].mxu0
        %v476 = vadd.f32 0.0, %v475
        %v477 = vpop.f32.mrb[0].mxu0
        %478 = vdwg.mxu0
        %v480 = vsel %vm405, %v390, 0
        %482 = vmatprep.subr.mxu0 0.0
        %483 = vmatpush1.msra.mxu0 %v394
        %484 = vmatprep.subr.mxu0 0.0
        %485 = vmatpush1.msra.mxu0 0.0
        %486 = vmatprep.subr.mxu0 0.0
        %487 = vmatpush1.msra.mxu0 0.0
        %488 = vmatprep.subr.mxu0 0.0
        %489 = vmatpush1.msra.mxu0 0.0
        %490 = vmatprep.subr.mxu0 0.0
        %491 = vmatpush1.msra.mxu0 0.0
        %492 = vmatprep.subr.mxu0 0.0
        %493 = vmatpush1.msra.mxu0 0.0
        %494 = vmatprep.subr.mxu0 0.0
        %495 = vmatpush1.msra.mxu0 0.0
        %496 = vmatprep.subr.mxu0 0.0
        %497 = vmatpush1.msra.mxu0 0.0
        %498 = vmatprep.subr.mxu0 0.0
        %499 = vmatpush1.msra.mxu0 0.0
        %500 = vmatprep.subr.mxu0 0.0
        %501 = vmatpush1.msra.mxu0 0.0
        %502 = vmatprep.subr.mxu0 0.0
        %503 = vmatpush1.msra.mxu0 0.0
        %504 = vmatprep.subr.mxu0 0.0
        %505 = vmatpush1.msra.mxu0 0.0
        %506 = vmatprep.subr.mxu0 0.0
        %507 = vmatpush1.msra.mxu0 0.0
        %508 = vmatprep.subr.mxu0 0.0
        %509 = vmatpush1.msra.mxu0 0.0
        %510 = vmatprep.subr.mxu0 0.0
        %511 = vmatpush1.msra.mxu0 0.0
        %512 = vmatprep.subr.mxu0 0.0
        %513 = vmatpush1.msra.mxu0 0.0
        %514 = vmatprep.subr.mxu0 0.0
        %515 = vmatpush1.msra.mxu0 0.0
        %516 = vmatprep.subr.mxu0 0.0
        %517 = vmatpush1.msra.mxu0 0.0
        %518 = vmatprep.subr.mxu0 0.0
        %519 = vmatpush1.msra.mxu0 0.0
        %520 = vmatprep.subr.mxu0 0.0
        %521 = vmatpush1.msra.mxu0 0.0
        %522 = vmatprep.subr.mxu0 0.0
        %523 = vmatpush1.msra.mxu0 0.0
        %524 = vmatprep.subr.mxu0 0.0
        %525 = vmatpush1.msra.mxu0 0.0
        %526 = vmatprep.subr.mxu0 0.0
        %527 = vmatpush1.msra.mxu0 0.0
        %528 = vmatprep.subr.mxu0 0.0
        %529 = vmatpush1.msra.mxu0 0.0
        %530 = vmatprep.subr.mxu0 0.0
        %531 = vmatpush1.msra.mxu0 0.0
        %532 = vmatprep.subr.mxu0 0.0
        %533 = vmatpush1.msra.mxu0 0.0
        %534 = vmatprep.subr.mxu0 0.0
        %535 = vmatpush1.msra.mxu0 0.0
        %536 = vmatprep.subr.mxu0 0.0
        %537 = vmatpush1.msra.mxu0 0.0
        %538 = vmatprep.subr.mxu0 0.0
        %539 = vmatpush1.msra.mxu0 0.0
        %540 = vmatprep.subr.mxu0 0.0
        %541 = vmatpush1.msra.mxu0 0.0
        %542 = vmatprep.subr.mxu0 0.0
        %543 = vmatpush1.msra.mxu0 0.0
        %544 = vmatprep.subr.mxu0 0.0
        %545 = vmatpush1.msra.mxu0 0.0
        %546 = vmatprep.mubr.f32.mxu0 0.0
        %547 = vmatmul.mubr.f32.gmra.mrb[0].mxu0 %v480
        %v548 = vpop.f32.mrb[0].mxu0
        %v549 = vadd.f32 0.0, %v548
        %v550 = vpop.f32.mrb[0].mxu0
        %551 = vdwg.mxu0
        %v553 = vsel %vm405, %v391, 0
        %555 = vmatprep.subr.mxu0 0.0
        %556 = vmatpush1.msra.mxu0 %v395
        %557 = vmatprep.subr.mxu0 0.0
        %558 = vmatpush1.msra.mxu0 0.0
        %559 = vmatprep.subr.mxu0 0.0
        %560 = vmatpush1.msra.mxu0 0.0
        %561 = vmatprep.subr.mxu0 0.0
        %562 = vmatpush1.msra.mxu0 0.0
        %563 = vmatprep.subr.mxu0 0.0
        %564 = vmatpush1.msra.mxu0 0.0
        %565 = vmatprep.subr.mxu0 0.0
        %566 = vmatpush1.msra.mxu0 0.0
        %567 = vmatprep.subr.mxu0 0.0
        %568 = vmatpush1.msra.mxu0 0.0
        %569 = vmatprep.subr.mxu0 0.0
        %570 = vmatpush1.msra.mxu0 0.0
        %571 = vmatprep.subr.mxu0 0.0
        %572 = vmatpush1.msra.mxu0 0.0
        %573 = vmatprep.subr.mxu0 0.0
        %574 = vmatpush1.msra.mxu0 0.0
        %575 = vmatprep.subr.mxu0 0.0
        %576 = vmatpush1.msra.mxu0 0.0
        %577 = vmatprep.subr.mxu0 0.0
        %578 = vmatpush1.msra.mxu0 0.0
        %579 = vmatprep.subr.mxu0 0.0
        %580 = vmatpush1.msra.mxu0 0.0
        %581 = vmatprep.subr.mxu0 0.0
        %582 = vmatpush1.msra.mxu0 0.0
        %583 = vmatprep.subr.mxu0 0.0
        %584 = vmatpush1.msra.mxu0 0.0
        %585 = vmatprep.subr.mxu0 0.0
        %586 = vmatpush1.msra.mxu0 0.0
        %587 = vmatprep.subr.mxu0 0.0
        %588 = vmatpush1.msra.mxu0 0.0
        %589 = vmatprep.subr.mxu0 0.0
        %590 = vmatpush1.msra.mxu0 0.0
        %591 = vmatprep.subr.mxu0 0.0
        %592 = vmatpush1.msra.mxu0 0.0
        %593 = vmatprep.subr.mxu0 0.0
        %594 = vmatpush1.msra.mxu0 0.0
        %595 = vmatprep.subr.mxu0 0.0
        %596 = vmatpush1.msra.mxu0 0.0
        %597 = vmatprep.subr.mxu0 0.0
        %598 = vmatpush1.msra.mxu0 0.0
        %599 = vmatprep.subr.mxu0 0.0
        %600 = vmatpush1.msra.mxu0 0.0
        %601 = vmatprep.subr.mxu0 0.0
        %602 = vmatpush1.msra.mxu0 0.0
        %603 = vmatprep.subr.mxu0 0.0
        %604 = vmatpush1.msra.mxu0 0.0
        %605 = vmatprep.subr.mxu0 0.0
        %606 = vmatpush1.msra.mxu0 0.0
        %607 = vmatprep.subr.mxu0 0.0
        %608 = vmatpush1.msra.mxu0 0.0
        %609 = vmatprep.subr.mxu0 0.0
        %610 = vmatpush1.msra.mxu0 0.0
        %611 = vmatprep.subr.mxu0 0.0
        %612 = vmatpush1.msra.mxu0 0.0
        %613 = vmatprep.subr.mxu0 0.0
        %614 = vmatpush1.msra.mxu0 0.0
        %615 = vmatprep.subr.mxu0 0.0
        %616 = vmatpush1.msra.mxu0 0.0
        %617 = vmatprep.subr.mxu0 0.0
        %618 = vmatpush1.msra.mxu0 0.0
        %619 = vmatprep.mubr.f32.mxu0 0.0
        %620 = vmatmul.mubr.f32.gmra.mrb[0].mxu0 %v553
        %v621 = vpop.f32.mrb[0].mxu0
        %v622 = vadd.f32 0.0, %v621
        %v623 = vpop.f32.mrb[0].mxu0
        %624 = vdwg.mxu0
        %v626 = vsel %vm405, %v392, 0
        %628 = vmatprep.subr.mxu0 0.0
        %629 = vmatpush1.msra.mxu0 %v396
        %630 = vmatprep.subr.mxu0 0.0
        %631 = vmatpush1.msra.mxu0 0.0
        %632 = vmatprep.subr.mxu0 0.0
        %633 = vmatpush1.msra.mxu0 0.0
        %634 = vmatprep.subr.mxu0 0.0
        %635 = vmatpush1.msra.mxu0 0.0
        %636 = vmatprep.subr.mxu0 0.0
        %637 = vmatpush1.msra.mxu0 0.0
        %638 = vmatprep.subr.mxu0 0.0
        %639 = vmatpush1.msra.mxu0 0.0
        %640 = vmatprep.subr.mxu0 0.0
        %641 = vmatpush1.msra.mxu0 0.0
        %642 = vmatprep.subr.mxu0 0.0
        %643 = vmatpush1.msra.mxu0 0.0
        %644 = vmatprep.subr.mxu0 0.0
        %645 = vmatpush1.msra.mxu0 0.0
        %646 = vmatprep.subr.mxu0 0.0
        %647 = vmatpush1.msra.mxu0 0.0
        %648 = vmatprep.subr.mxu0 0.0
        %649 = vmatpush1.msra.mxu0 0.0
        %650 = vmatprep.subr.mxu0 0.0
        %651 = vmatpush1.msra.mxu0 0.0
        %652 = vmatprep.subr.mxu0 0.0
        %653 = vmatpush1.msra.mxu0 0.0
        %654 = vmatprep.subr.mxu0 0.0
        %655 = vmatpush1.msra.mxu0 0.0
        %656 = vmatprep.subr.mxu0 0.0
        %657 = vmatpush1.msra.mxu0 0.0
        %658 = vmatprep.subr.mxu0 0.0
        %659 = vmatpush1.msra.mxu0 0.0
        %660 = vmatprep.subr.mxu0 0.0
        %661 = vmatpush1.msra.mxu0 0.0
        %662 = vmatprep.subr.mxu0 0.0
        %663 = vmatpush1.msra.mxu0 0.0
        %664 = vmatprep.subr.mxu0 0.0
        %665 = vmatpush1.msra.mxu0 0.0
        %666 = vmatprep.subr.mxu0 0.0
        %667 = vmatpush1.msra.mxu0 0.0
        %668 = vmatprep.subr.mxu0 0.0
        %669 = vmatpush1.msra.mxu0 0.0
        %670 = vmatprep.subr.mxu0 0.0
        %671 = vmatpush1.msra.mxu0 0.0
        %672 = vmatprep.subr.mxu0 0.0
        %673 = vmatpush1.msra.mxu0 0.0
        %674 = vmatprep.subr.mxu0 0.0
        %675 = vmatpush1.msra.mxu0 0.0
        %676 = vmatprep.subr.mxu0 0.0
        %677 = vmatpush1.msra.mxu0 0.0
        %678 = vmatprep.subr.mxu0 0.0
        %679 = vmatpush1.msra.mxu0 0.0
        %680 = vmatprep.subr.mxu0 0.0
        %681 = vmatpush1.msra.mxu0 0.0
        %682 = vmatprep.subr.mxu0 0.0
        %683 = vmatpush1.msra.mxu0 0.0
        %684 = vmatprep.subr.mxu0 0.0
        %685 = vmatpush1.msra.mxu0 0.0
        %686 = vmatprep.subr.mxu0 0.0
        %687 = vmatpush1.msra.mxu0 0.0
        %688 = vmatprep.subr.mxu0 0.0
        %689 = vmatpush1.msra.mxu0 0.0
        %690 = vmatprep.subr.mxu0 0.0
        %691 = vmatpush1.msra.mxu0 0.0
        %692 = vmatprep.mubr.f32.mxu0 0.0
        %693 = vmatmul.mubr.f32.gmra.mrb[0].mxu0 %v626
        %v694 = vpop.f32.mrb[0].mxu0
        %v695 = vadd.f32 0.0, %v694
        %v696 = vpop.f32.mrb[0].mxu0
        %697 = vdwg.mxu0
        %v698 = vmul.f32 %v476, 0.35355338
        %v699 = vmul.f32 %v549, 0.35355338
        %v700 = vmul.f32 %v622, 0.35355338
        %v701 = vmul.f32 %v695, 0.35355338
        %vm702 = vcmask 130048
        %v703 = vsel %vm702, %v698, -inf
        %704 = vmax.xlane.f32.xlu0 %v703
        %v705 = vpop.xlane.xlu0 %704
        %v706 = vsel %vm702, %v699, -inf
        %707 = vmax.xlane.f32.xlu0 %v706
        %v708 = vpop.xlane.xlu0 %707
        %v709 = vsel %vm702, %v700, -inf
        %710 = vmax.xlane.f32.xlu0 %v709
        %v711 = vpop.xlane.xlu0 %710
        %v712 = vsel %vm702, %v701, -inf
        %713 = vmax.xlane.f32.xlu0 %v712
        %v714 = vpop.xlane.xlu0 %713
        %v715 = vsub.f32 %v698, %v705
        %v716 = vsub.f32 %v699, %v708
        %v717 = vsub.f32 %v700, %v711
        %v718 = vsub.f32 %v701, %v714
        %v719 = vmul.f32 %v715, 1.442695
        %v720 = vpow.pop %v719
        %v721 = vmul.f32 %v716, 1.442695
        %v722 = vpow.pop %v721
        %v723 = vmul.f32 %v717, 1.442695
        %v724 = vpow.pop %v723
        %v725 = vmul.f32 %v718, 1.442695
        %v726 = vpow.pop %v725
        %v727 = vsel %vm702, %v720, 0.0
        %728 = vadd.xlane.f32.xlu0 %v727
        %v729 = vpop.xlane.xlu0 %728
        %v730 = vsel %vm702, %v722, 0.0
        %731 = vadd.xlane.f32.xlu0 %v730
        %v732 = vpop.xlane.xlu0 %731
        %v733 = vsel %vm702, %v724, 0.0
        %734 = vadd.xlane.f32.xlu0 %v733
        %v735 = vpop.xlane.xlu0 %734
        %v736 = vsel %vm702, %v726, 0.0
        %737 = vadd.xlane.f32.xlu0 %v736
        %v738 = vpop.xlane.xlu0 %737
        %v739 = vrcp.pop %v729
        %v740 = vmul.f32 %v720, %v739
        %v741 = vrcp.pop %v732
        %v742 = vmul.f32 %v722, %v741
        %v743 = vrcp.pop %v735
        %v744 = vmul.f32 %v724, %v743
        %v745 = vrcp.pop %v738
        %v746 = vmul.f32 %v726, %v745
        %v748 = vsel %vm702, %v740, 0
        %750 = vmatprep.subr.mxu0 0.0
        %751 = vmatpush1.msra.mxu0 %v397
        %752 = vmatprep.subr.mxu0 0.0
        %753 = vmatpush1.msra.mxu0 %v398
        %754 = vmatprep.subr.mxu0 0.0
        %755 = vmatpush1.msra.mxu0 0.0
        %756 = vmatprep.subr.mxu0 0.0
        %757 = vmatpush1.msra.mxu0 0.0
        %758 = vmatprep.subr.mxu0 0.0
        %759 = vmatpush1.msra.mxu0 0.0
        %760 = vmatprep.subr.mxu0 0.0
        %761 = vmatpush1.msra.mxu0 0.0
        %762 = vmatprep.subr.mxu0 0.0
        %763 = vmatpush1.msra.mxu0 0.0
        %764 = vmatprep.subr.mxu0 0.0
        %765 = vmatpush1.msra.mxu0 0.0
        %766 = vmatprep.subr.mxu0 0.0
        %767 = vmatpush1.msra.mxu0 0.0
        %768 = vmatprep.subr.mxu0 0.0
        %769 = vmatpush1.msra.mxu0 0.0
        %770 = vmatprep.subr.mxu0 0.0
        %771 = vmatpush1.msra.mxu0 0.0
        %772 = vmatprep.subr.mxu0 0.0
        %773 = vmatpush1.msra.mxu0 0.0
        %774 = vmatprep.subr.mxu0 0.0
        %775 = vmatpush1.msra.mxu0 0.0
        %776 = vmatprep.subr.mxu0 0.0
        %777 = vmatpush1.msra.mxu0 0.0
        %778 = vmatprep.subr.mxu0 0.0
        %779 = vmatpush1.msra.mxu0 0.0
        %780 = vmatprep.subr.mxu0 0.0
        %781 = vmatpush1.msra.mxu0 0.0
        %782 = vmatprep.subr.mxu0 0.0
        %783 = vmatpush1.msra.mxu0 0.0
        %784 = vmatprep.subr.mxu0 0.0
        %785 = vmatpush1.msra.mxu0 0.0
        %786 = vmatprep.subr.mxu0 0.0
        %787 = vmatpush1.msra.mxu0 0.0
        %788 = vmatprep.subr.mxu0 0.0
        %789 = vmatpush1.msra.mxu0 0.0
        %790 = vmatprep.subr.mxu0 0.0
        %791 = vmatpush1.msra.mxu0 0.0
        %792 = vmatprep.subr.mxu0 0.0
        %793 = vmatpush1.msra.mxu0 0.0
        %794 = vmatprep.subr.mxu0 0.0
        %795 = vmatpush1.msra.mxu0 0.0
        %796 = vmatprep.subr.mxu0 0.0
        %797 = vmatpush1.msra.mxu0 0.0
        %798 = vmatprep.subr.mxu0 0.0
        %799 = vmatpush1.msra.mxu0 0.0
        %800 = vmatprep.subr.mxu0 0.0
        %801 = vmatpush1.msra.mxu0 0.0
        %802 = vmatprep.subr.mxu0 0.0
        %803 = vmatpush1.msra.mxu0 0.0
        %804 = vmatprep.subr.mxu0 0.0
        %805 = vmatpush1.msra.mxu0 0.0
        %806 = vmatprep.subr.mxu0 0.0
        %807 = vmatpush1.msra.mxu0 0.0
        %808 = vmatprep.subr.mxu0 0.0
        %809 = vmatpush1.msra.mxu0 0.0
        %810 = vmatprep.subr.mxu0 0.0
        %811 = vmatpush1.msra.mxu0 0.0
        %812 = vmatprep.subr.mxu0 0.0
        %813 = vmatpush1.msra.mxu0 0.0
        %814 = vmatprep.mubr.f32.mxu0 0.0
        %815 = vmatmul.mubr.f32.gmra.mrb[0].mxu0 %v748
        %v816 = vpop.f32.mrb[0].mxu0
        %v817 = vadd.f32 0.0, %v816
        %v818 = vpop.f32.mrb[0].mxu0
        %819 = vdwg.mxu0
        %v821 = vsel %vm702, %v742, 0
        %823 = vmatprep.subr.mxu0 0.0
        %824 = vmatpush1.msra.mxu0 %v399
        %825 = vmatprep.subr.mxu0 0.0
        %826 = vmatpush1.msra.mxu0 %v400
        %827 = vmatprep.subr.mxu0 0.0
        %828 = vmatpush1.msra.mxu0 0.0
        %829 = vmatprep.subr.mxu0 0.0
        %830 = vmatpush1.msra.mxu0 0.0
        %831 = vmatprep.subr.mxu0 0.0
        %832 = vmatpush1.msra.mxu0 0.0
        %833 = vmatprep.subr.mxu0 0.0
        %834 = vmatpush1.msra.mxu0 0.0
        %835 = vmatprep.subr.mxu0 0.0
        %836 = vmatpush1.msra.mxu0 0.0
        %837 = vmatprep.subr.mxu0 0.0
        %838 = vmatpush1.msra.mxu0 0.0
        %839 = vmatprep.subr.mxu0 0.0
        %840 = vmatpush1.msra.mxu0 0.0
        %841 = vmatprep.subr.mxu0 0.0
        %842 = vmatpush1.msra.mxu0 0.0
        %843 = vmatprep.subr.mxu0 0.0
        %844 = vmatpush1.msra.mxu0 0.0
        %845 = vmatprep.subr.mxu0 0.0
        %846 = vmatpush1.msra.mxu0 0.0
        %847 = vmatprep.subr.mxu0 0.0
        %848 = vmatpush1.msra.mxu0 0.0
        %849 = vmatprep.subr.mxu0 0.0
        %850 = vmatpush1.msra.mxu0 0.0
        %851 = vmatprep.subr.mxu0 0.0
        %852 = vmatpush1.msra.mxu0 0.0
        %853 = vmatprep.subr.mxu0 0.0
        %854 = vmatpush1.msra.mxu0 0.0
        %855 = vmatprep.subr.mxu0 0.0
        %856 = vmatpush1.msra.mxu0 0.0
        %857 = vmatprep.subr.mxu0 0.0
        %858 = vmatpush1.msra.mxu0 0.0
        %859 = vmatprep.subr.mxu0 0.0
        %860 = vmatpush1.msra.mxu0 0.0
        %861 = vmatprep.subr.mxu0 0.0
        %862 = vmatpush1.msra.mxu0 0.0
        %863 = vmatprep.subr.mxu0 0.0
        %864 = vmatpush1.msra.mxu0 0.0
        %865 = vmatprep.subr.mxu0 0.0
        %866 = vmatpush1.msra.mxu0 0.0
        %867 = vmatprep.subr.mxu0 0.0
        %868 = vmatpush1.msra.mxu0 0.0
        %869 = vmatprep.subr.mxu0 0.0
        %870 = vmatpush1.msra.mxu0 0.0
        %871 = vmatprep.subr.mxu0 0.0
        %872 = vmatpush1.msra.mxu0 0.0
        %873 = vmatprep.subr.mxu0 0.0
        %874 = vmatpush1.msra.mxu0 0.0
        %875 = vmatprep.subr.mxu0 0.0
        %876 = vmatpush1.msra.mxu0 0.0
        %877 = vmatprep.subr.mxu0 0.0
        %878 = vmatpush1.msra.mxu0 0.0
        %879 = vmatprep.subr.mxu0 0.0
        %880 = vmatpush1.msra.mxu0 0.0
        %881 = vmatprep.subr.mxu0 0.0
        %882 = vmatpush1.msra.mxu0 0.0
        %883 = vmatprep.subr.mxu0 0.0
        %884 = vmatpush1.msra.mxu0 0.0
        %885 = vmatprep.subr.mxu0 0.0
        %886 = vmatpush1.msra.mxu0 0.0
        %887 = vmatprep.mubr.f32.mxu0 0.0
        %888 = vmatmul.mubr.f32.gmra.mrb[0].mxu0 %v821
        %v889 = vpop.f32.mrb[0].mxu0
        %v890 = vadd.f32 0.0, %v889
        %v891 = vpop.f32.mrb[0].mxu0
        %892 = vdwg.mxu0
        %v894 = vsel %vm702, %v744, 0
        %896 = vmatprep.subr.mxu0 0.0
        %897 = vmatpush1.msra.mxu0 %v401
        %898 = vmatprep.subr.mxu0 0.0
        %899 = vmatpush1.msra.mxu0 %v402
        %900 = vmatprep.subr.mxu0 0.0
        %901 = vmatpush1.msra.mxu0 0.0
        %902 = vmatprep.subr.mxu0 0.0
        %903 = vmatpush1.msra.mxu0 0.0
        %904 = vmatprep.subr.mxu0 0.0
        %905 = vmatpush1.msra.mxu0 0.0
        %906 = vmatprep.subr.mxu0 0.0
        %907 = vmatpush1.msra.mxu0 0.0
        %908 = vmatprep.subr.mxu0 0.0
        %909 = vmatpush1.msra.mxu0 0.0
        %910 = vmatprep.subr.mxu0 0.0
        %911 = vmatpush1.msra.mxu0 0.0
        %912 = vmatprep.subr.mxu0 0.0
        %913 = vmatpush1.msra.mxu0 0.0
        %914 = vmatprep.subr.mxu0 0.0
        %915 = vmatpush1.msra.mxu0 0.0
        %916 = vmatprep.subr.mxu0 0.0
        %917 = vmatpush1.msra.mxu0 0.0
        %918 = vmatprep.subr.mxu0 0.0
        %919 = vmatpush1.msra.mxu0 0.0
        %920 = vmatprep.subr.mxu0 0.0
        %921 = vmatpush1.msra.mxu0 0.0
        %922 = vmatprep.subr.mxu0 0.0
        %923 = vmatpush1.msra.mxu0 0.0
        %924 = vmatprep.subr.mxu0 0.0
        %925 = vmatpush1.msra.mxu0 0.0
        %926 = vmatprep.subr.mxu0 0.0
        %927 = vmatpush1.msra.mxu0 0.0
        %928 = vmatprep.subr.mxu0 0.0
        %929 = vmatpush1.msra.mxu0 0.0
        %930 = vmatprep.subr.mxu0 0.0
        %931 = vmatpush1.msra.mxu0 0.0
        %932 = vmatprep.subr.mxu0 0.0
        %933 = vmatpush1.msra.mxu0 0.0
        %934 = vmatprep.subr.mxu0 0.0
        %935 = vmatpush1.msra.mxu0 0.0
        %936 = vmatprep.subr.mxu0 0.0
        %937 = vmatpush1.msra.mxu0 0.0
        %938 = vmatprep.subr.mxu0 0.0
        %939 = vmatpush1.msra.mxu0 0.0
        %940 = vmatprep.subr.mxu0 0.0
        %941 = vmatpush1.msra.mxu0 0.0
        %942 = vmatprep.subr.mxu0 0.0
        %943 = vmatpush1.msra.mxu0 0.0
        %944 = vmatprep.subr.mxu0 0.0
        %945 = vmatpush1.msra.mxu0 0.0
        %946 = vmatprep.subr.mxu0 0.0
        %947 = vmatpush1.msra.mxu0 0.0
        %948 = vmatprep.subr.mxu0 0.0
        %949 = vmatpush1.msra.mxu0 0.0
        %950 = vmatprep.subr.mxu0 0.0
        %951 = vmatpush1.msra.mxu0 0.0
        %952 = vmatprep.subr.mxu0 0.0
        %953 = vmatpush1.msra.mxu0 0.0
        %954 = vmatprep.subr.mxu0 0.0
        %955 = vmatpush1.msra.mxu0 0.0
        %956 = vmatprep.subr.mxu0 0.0
        %957 = vmatpush1.msra.mxu0 0.0
        %958 = vmatprep.subr.mxu0 0.0
        %959 = vmatpush1.msra.mxu0 0.0
        %960 = vmatprep.mubr.f32.mxu0 0.0
        %961 = vmatmul.mubr.f32.gmra.mrb[0].mxu0 %v894
        %v962 = vpop.f32.mrb[0].mxu0
        %v963 = vadd.f32 0.0, %v962
        %v964 = vpop.f32.mrb[0].mxu0
        %965 = vdwg.mxu0
        %v967 = vsel %vm702, %v746, 0
        %969 = vmatprep.subr.mxu0 0.0
        %970 = vmatpush1.msra.mxu0 %v403
        %971 = vmatprep.subr.mxu0 0.0
        %972 = vmatpush1.msra.mxu0 %v404
        %973 = vmatprep.subr.mxu0 0.0
        %974 = vmatpush1.msra.mxu0 0.0
        %975 = vmatprep.subr.mxu0 0.0
        %976 = vmatpush1.msra.mxu0 0.0
        %977 = vmatprep.subr.mxu0 0.0
        %978 = vmatpush1.msra.mxu0 0.0
        %979 = vmatprep.subr.mxu0 0.0
        %980 = vmatpush1.msra.mxu0 0.0
        %981 = vmatprep.subr.mxu0 0.0
        %982 = vmatpush1.msra.mxu0 0.0
        %983 = vmatprep.subr.mxu0 0.0
        %984 = vmatpush1.msra.mxu0 0.0
        %985 = vmatprep.subr.mxu0 0.0
        %986 = vmatpush1.msra.mxu0 0.0
        %987 = vmatprep.subr.mxu0 0.0
        %988 = vmatpush1.msra.mxu0 0.0
        %989 = vmatprep.subr.mxu0 0.0
        %990 = vmatpush1.msra.mxu0 0.0
        %991 = vmatprep.subr.mxu0 0.0
        %992 = vmatpush1.msra.mxu0 0.0
        %993 = vmatprep.subr.mxu0 0.0
        %994 = vmatpush1.msra.mxu0 0.0
        %995 = vmatprep.subr.mxu0 0.0
        %996 = vmatpush1.msra.mxu0 0.0
        %997 = vmatprep.subr.mxu0 0.0
        %998 = vmatpush1.msra.mxu0 0.0
        %999 = vmatprep.subr.mxu0 0.0
        %1000 = vmatpush1.msra.mxu0 0.0
        %1001 = vmatprep.subr.mxu0 0.0
        %1002 = vmatpush1.msra.mxu0 0.0
        %1003 = vmatprep.subr.mxu0 0.0
        %1004 = vmatpush1.msra.mxu0 0.0
        %1005 = vmatprep.subr.mxu0 0.0
        %1006 = vmatpush1.msra.mxu0 0.0
        %1007 = vmatprep.subr.mxu0 0.0
        %1008 = vmatpush1.msra.mxu0 0.0
        %1009 = vmatprep.subr.mxu0 0.0
        %1010 = vmatpush1.msra.mxu0 0.0
        %1011 = vmatprep.subr.mxu0 0.0
        %1012 = vmatpush1.msra.mxu0 0.0
        %1013 = vmatprep.subr.mxu0 0.0
        %1014 = vmatpush1.msra.mxu0 0.0
        %1015 = vmatprep.subr.mxu0 0.0
        %1016 = vmatpush1.msra.mxu0 0.0
        %1017 = vmatprep.subr.mxu0 0.0
        %1018 = vmatpush1.msra.mxu0 0.0
        %1019 = vmatprep.subr.mxu0 0.0
        %1020 = vmatpush1.msra.mxu0 0.0
        %1021 = vmatprep.subr.mxu0 0.0
        %1022 = vmatpush1.msra.mxu0 0.0
        %1023 = vmatprep.subr.mxu0 0.0
        %1024 = vmatpush1.msra.mxu0 0.0
        %1025 = vmatprep.subr.mxu0 0.0
        %1026 = vmatpush1.msra.mxu0 0.0
        %1027 = vmatprep.subr.mxu0 0.0
        %1028 = vmatpush1.msra.mxu0 0.0
        %1029 = vmatprep.subr.mxu0 0.0
        %1030 = vmatpush1.msra.mxu0 0.0
        %1031 = vmatprep.subr.mxu0 0.0
        %1032 = vmatpush1.msra.mxu0 0.0
        %1033 = vmatprep.mubr.f32.mxu0 0.0
        %1034 = vmatmul.mubr.f32.gmra.mrb[0].mxu0 %v967
        %v1035 = vpop.f32.mrb[0].mxu0
        %v1036 = vadd.f32 0.0, %v1035
        %v1037 = vpop.f32.mrb[0].mxu0
        %1038 = vdwg.mxu0
        %v1039 = vld [vmem:[%s3] sm:$0xff]
        %v1040 = vld [vmem:[%s3 + $0x8] sm:$0xff]
        %v1041 = vld [vmem:[%s3 + $0x10] sm:$0xff]
        %v1042 = vld [vmem:[%s3 + $0x18] sm:$0xff]
        %v1044 = vsel %vm405, %v817, 0
        %1046 = vmatprep.subr.mxu0 0.0
        %1047 = vmatpush1.msra.mxu0 %v1039
        %1048 = vmatprep.subr.mxu0 0.0
        %1049 = vmatpush1.msra.mxu0 0.0
        %1050 = vmatprep.subr.mxu0 0.0
        %1051 = vmatpush1.msra.mxu0 0.0
        %1052 = vmatprep.subr.mxu0 0.0
        %1053 = vmatpush1.msra.mxu0 0.0
        %1054 = vmatprep.subr.mxu0 0.0
        %1055 = vmatpush1.msra.mxu0 0.0
        %1056 = vmatprep.subr.mxu0 0.0
        %1057 = vmatpush1.msra.mxu0 0.0
        %1058 = vmatprep.subr.mxu0 0.0
        %1059 = vmatpush1.msra.mxu0 0.0
        %1060 = vmatprep.subr.mxu0 0.0
        %1061 = vmatpush1.msra.mxu0 0.0
        %1062 = vmatprep.subr.mxu0 0.0
        %1063 = vmatpush1.msra.mxu0 0.0
        %1064 = vmatprep.subr.mxu0 0.0
        %1065 = vmatpush1.msra.mxu0 0.0
        %1066 = vmatprep.subr.mxu0 0.0
        %1067 = vmatpush1.msra.mxu0 0.0
        %1068 = vmatprep.subr.mxu0 0.0
        %1069 = vmatpush1.msra.mxu0 0.0
        %1070 = vmatprep.subr.mxu0 0.0
        %1071 = vmatpush1.msra.mxu0 0.0
        %1072 = vmatprep.subr.mxu0 0.0
        %1073 = vmatpush1.msra.mxu0 0.0
        %1074 = vmatprep.subr.mxu0 0.0
        %1075 = vmatpush1.msra.mxu0 0.0
        %1076 = vmatprep.subr.mxu0 0.0
        %1077 = vmatpush1.msra.mxu0 0.0
        %1078 = vmatprep.subr.mxu0 0.0
        %1079 = vmatpush1.msra.mxu0 0.0
        %1080 = vmatprep.subr.mxu0 0.0
        %1081 = vmatpush1.msra.mxu0 0.0
        %1082 = vmatprep.subr.mxu0 0.0
        %1083 = vmatpush1.msra.mxu0 0.0
        %1084 = vmatprep.subr.mxu0 0.0
        %1085 = vmatpush1.msra.mxu0 0.0
        %1086 = vmatprep.subr.mxu0 0.0
        %1087 = vmatpush1.msra.mxu0 0.0
        %1088 = vmatprep.subr.mxu0 0.0
        %1089 = vmatpush1.msra.mxu0 0.0
        %1090 = vmatprep.subr.mxu0 0.0
        %1091 = vmatpush1.msra.mxu0 0.0
        %1092 = vmatprep.subr.mxu0 0.0
        %1093 = vmatpush1.msra.mxu0 0.0
        %1094 = vmatprep.subr.mxu0 0.0
        %1095 = vmatpush1.msra.mxu0 0.0
        %1096 = vmatprep.subr.mxu0 0.0
        %1097 = vmatpush1.msra.mxu0 0.0
        %1098 = vmatprep.subr.mxu0 0.0
        %1099 = vmatpush1.msra.mxu0 0.0
        %1100 = vmatprep.subr.mxu0 0.0
        %1101 = vmatpush1.msra.mxu0 0.0
        %1102 = vmatprep.subr.mxu0 0.0
        %1103 = vmatpush1.msra.mxu0 0.0
        %1104 = vmatprep.subr.mxu0 0.0
        %1105 = vmatpush1.msra.mxu0 0.0
        %1106 = vmatprep.subr.mxu0 0.0
        %1107 = vmatpush1.msra.mxu0 0.0
        %1108 = vmatprep.subr.mxu0 0.0
        %1109 = vmatpush1.msra.mxu0 0.0
        %1110 = vmatprep.mubr.f32.mxu0 0.0
        %1111 = vmatmul.mubr.f32.gmra.mrb[0].mxu0 %v1044
        %v1112 = vpop.f32.mrb[0].mxu0
        %v1113 = vadd.f32 0.0, %v1112
        %v1114 = vpop.f32.mrb[0].mxu0
        %1115 = vdwg.mxu0
        %v1117 = vsel %vm405, %v890, 0
        %1119 = vmatprep.subr.mxu0 0.0
        %1120 = vmatpush1.msra.mxu0 %v1040
        %1121 = vmatprep.subr.mxu0 0.0
        %1122 = vmatpush1.msra.mxu0 0.0
        %1123 = vmatprep.subr.mxu0 0.0
        %1124 = vmatpush1.msra.mxu0 0.0
        %1125 = vmatprep.subr.mxu0 0.0
        %1126 = vmatpush1.msra.mxu0 0.0
        %1127 = vmatprep.subr.mxu0 0.0
        %1128 = vmatpush1.msra.mxu0 0.0
        %1129 = vmatprep.subr.mxu0 0.0
        %1130 = vmatpush1.msra.mxu0 0.0
        %1131 = vmatprep.subr.mxu0 0.0
        %1132 = vmatpush1.msra.mxu0 0.0
        %1133 = vmatprep.subr.mxu0 0.0
        %1134 = vmatpush1.msra.mxu0 0.0
        %1135 = vmatprep.subr.mxu0 0.0
        %1136 = vmatpush1.msra.mxu0 0.0
        %1137 = vmatprep.subr.mxu0 0.0
        %1138 = vmatpush1.msra.mxu0 0.0
        %1139 = vmatprep.subr.mxu0 0.0
        %1140 = vmatpush1.msra.mxu0 0.0
        %1141 = vmatprep.subr.mxu0 0.0
        %1142 = vmatpush1.msra.mxu0 0.0
        %1143 = vmatprep.subr.mxu0 0.0
        %1144 = vmatpush1.msra.mxu0 0.0
        %1145 = vmatprep.subr.mxu0 0.0
        %1146 = vmatpush1.msra.mxu0 0.0
        %1147 = vmatprep.subr.mxu0 0.0
        %1148 = vmatpush1.msra.mxu0 0.0
        %1149 = vmatprep.subr.mxu0 0.0
        %1150 = vmatpush1.msra.mxu0 0.0
        %1151 = vmatprep.subr.mxu0 0.0
        %1152 = vmatpush1.msra.mxu0 0.0
        %1153 = vmatprep.subr.mxu0 0.0
        %1154 = vmatpush1.msra.mxu0 0.0
        %1155 = vmatprep.subr.mxu0 0.0
        %1156 = vmatpush1.msra.mxu0 0.0
        %1157 = vmatprep.subr.mxu0 0.0
        %1158 = vmatpush1.msra.mxu0 0.0
        %1159 = vmatprep.subr.mxu0 0.0
        %1160 = vmatpush1.msra.mxu0 0.0
        %1161 = vmatprep.subr.mxu0 0.0
        %1162 = vmatpush1.msra.mxu0 0.0
        %1163 = vmatprep.subr.mxu0 0.0
        %1164 = vmatpush1.msra.mxu0 0.0
        %1165 = vmatprep.subr.mxu0 0.0
        %1166 = vmatpush1.msra.mxu0 0.0
        %1167 = vmatprep.subr.mxu0 0.0
        %1168 = vmatpush1.msra.mxu0 0.0
        %1169 = vmatprep.subr.mxu0 0.0
        %1170 = vmatpush1.msra.mxu0 0.0
        %1171 = vmatprep.subr.mxu0 0.0
        %1172 = vmatpush1.msra.mxu0 0.0
        %1173 = vmatprep.subr.mxu0 0.0
        %1174 = vmatpush1.msra.mxu0 0.0
        %1175 = vmatprep.subr.mxu0 0.0
        %1176 = vmatpush1.msra.mxu0 0.0
        %1177 = vmatprep.subr.mxu0 0.0
        %1178 = vmatpush1.msra.mxu0 0.0
        %1179 = vmatprep.subr.mxu0 0.0
        %1180 = vmatpush1.msra.mxu0 0.0
        %1181 = vmatprep.subr.mxu0 0.0
        %1182 = vmatpush1.msra.mxu0 0.0
        %1183 = vmatprep.mubr.f32.mxu0 0.0
        %1184 = vmatmul.mubr.f32.gmra.mrb[0].mxu0 %v1117
        %v1185 = vpop.f32.mrb[0].mxu0
        %v1186 = vadd.f32 0.0, %v1185
        %v1187 = vpop.f32.mrb[0].mxu0
        %1188 = vdwg.mxu0
        %v1190 = vsel %vm405, %v963, 0
        %1192 = vmatprep.subr.mxu0 0.0
        %1193 = vmatpush1.msra.mxu0 %v1041
        %1194 = vmatprep.subr.mxu0 0.0
        %1195 = vmatpush1.msra.mxu0 0.0
        %1196 = vmatprep.subr.mxu0 0.0
        %1197 = vmatpush1.msra.mxu0 0.0
        %1198 = vmatprep.subr.mxu0 0.0
        %1199 = vmatpush1.msra.mxu0 0.0
        %1200 = vmatprep.subr.mxu0 0.0
        %1201 = vmatpush1.msra.mxu0 0.0
        %1202 = vmatprep.subr.mxu0 0.0
        %1203 = vmatpush1.msra.mxu0 0.0
        %1204 = vmatprep.subr.mxu0 0.0
        %1205 = vmatpush1.msra.mxu0 0.0
        %1206 = vmatprep.subr.mxu0 0.0
        %1207 = vmatpush1.msra.mxu0 0.0
        %1208 = vmatprep.subr.mxu0 0.0
        %1209 = vmatpush1.msra.mxu0 0.0
        %1210 = vmatprep.subr.mxu0 0.0
        %1211 = vmatpush1.msra.mxu0 0.0
        %1212 = vmatprep.subr.mxu0 0.0
        %1213 = vmatpush1.msra.mxu0 0.0
        %1214 = vmatprep.subr.mxu0 0.0
        %1215 = vmatpush1.msra.mxu0 0.0
        %1216 = vmatprep.subr.mxu0 0.0
        %1217 = vmatpush1.msra.mxu0 0.0
        %1218 = vmatprep.subr.mxu0 0.0
        %1219 = vmatpush1.msra.mxu0 0.0
        %1220 = vmatprep.subr.mxu0 0.0
        %1221 = vmatpush1.msra.mxu0 0.0
        %1222 = vmatprep.subr.mxu0 0.0
        %1223 = vmatpush1.msra.mxu0 0.0
        %1224 = vmatprep.subr.mxu0 0.0
        %1225 = vmatpush1.msra.mxu0 0.0
        %1226 = vmatprep.subr.mxu0 0.0
        %1227 = vmatpush1.msra.mxu0 0.0
        %1228 = vmatprep.subr.mxu0 0.0
        %1229 = vmatpush1.msra.mxu0 0.0
        %1230 = vmatprep.subr.mxu0 0.0
        %1231 = vmatpush1.msra.mxu0 0.0
        %1232 = vmatprep.subr.mxu0 0.0
        %1233 = vmatpush1.msra.mxu0 0.0
        %1234 = vmatprep.subr.mxu0 0.0
        %1235 = vmatpush1.msra.mxu0 0.0
        %1236 = vmatprep.subr.mxu0 0.0
        %1237 = vmatpush1.msra.mxu0 0.0
        %1238 = vmatprep.subr.mxu0 0.0
        %1239 = vmatpush1.msra.mxu0 0.0
        %1240 = vmatprep.subr.mxu0 0.0
        %1241 = vmatpush1.msra.mxu0 0.0
        %1242 = vmatprep.subr.mxu0 0.0
        %1243 = vmatpush1.msra.mxu0 0.0
        %1244 = vmatprep.subr.mxu0 0.0
        %1245 = vmatpush1.msra.mxu0 0.0
        %1246 = vmatprep.subr.mxu0 0.0
        %1247 = vmatpush1.msra.mxu0 0.0
        %1248 = vmatprep.subr.mxu0 0.0
        %1249 = vmatpush1.msra.mxu0 0.0
        %1250 = vmatprep.subr.mxu0 0.0
        %1251 = vmatpush1.msra.mxu0 0.0
        %1252 = vmatprep.subr.mxu0 0.0
        %1253 = vmatpush1.msra.mxu0 0.0
        %1254 = vmatprep.subr.mxu0 0.0
        %1255 = vmatpush1.msra.mxu0 0.0
        %1256 = vmatprep.mubr.f32.mxu0 0.0
        %1257 = vmatmul.mubr.f32.gmra.mrb[0].mxu0 %v1190
        %v1258 = vpop.f32.mrb[0].mxu0
        %v1259 = vadd.f32 0.0, %v1258
        %v1260 = vpop.f32.mrb[0].mxu0
        %1261 = vdwg.mxu0
        %v1263 = vsel %vm405, %v1036, 0
        %1265 = vmatprep.subr.mxu0 0.0
        %1266 = vmatpush1.msra.mxu0 %v1042
        %1267 = vmatprep.subr.mxu0 0.0
        %1268 = vmatpush1.msra.mxu0 0.0
        %1269 = vmatprep.subr.mxu0 0.0
        %1270 = vmatpush1.msra.mxu0 0.0
        %1271 = vmatprep.subr.mxu0 0.0
        %1272 = vmatpush1.msra.mxu0 0.0
        %1273 = vmatprep.subr.mxu0 0.0
        %1274 = vmatpush1.msra.mxu0 0.0
        %1275 = vmatprep.subr.mxu0 0.0
        %1276 = vmatpush1.msra.mxu0 0.0
        %1277 = vmatprep.subr.mxu0 0.0
        %1278 = vmatpush1.msra.mxu0 0.0
        %1279 = vmatprep.subr.mxu0 0.0
        %1280 = vmatpush1.msra.mxu0 0.0
        %1281 = vmatprep.subr.mxu0 0.0
        %1282 = vmatpush1.msra.mxu0 0.0
        %1283 = vmatprep.subr.mxu0 0.0
        %1284 = vmatpush1.msra.mxu0 0.0
        %1285 = vmatprep.subr.mxu0 0.0
        %1286 = vmatpush1.msra.mxu0 0.0
        %1287 = vmatprep.subr.mxu0 0.0
        %1288 = vmatpush1.msra.mxu0 0.0
        %1289 = vmatprep.subr.mxu0 0.0
        %1290 = vmatpush1.msra.mxu0 0.0
        %1291 = vmatprep.subr.mxu0 0.0
        %1292 = vmatpush1.msra.mxu0 0.0
        %1293 = vmatprep.subr.mxu0 0.0
        %1294 = vmatpush1.msra.mxu0 0.0
        %1295 = vmatprep.subr.mxu0 0.0
        %1296 = vmatpush1.msra.mxu0 0.0
        %1297 = vmatprep.subr.mxu0 0.0
        %1298 = vmatpush1.msra.mxu0 0.0
        %1299 = vmatprep.subr.mxu0 0.0
        %1300 = vmatpush1.msra.mxu0 0.0
        %1301 = vmatprep.subr.mxu0 0.0
        %1302 = vmatpush1.msra.mxu0 0.0
        %1303 = vmatprep.subr.mxu0 0.0
        %1304 = vmatpush1.msra.mxu0 0.0
        %1305 = vmatprep.subr.mxu0 0.0
        %1306 = vmatpush1.msra.mxu0 0.0
        %1307 = vmatprep.subr.mxu0 0.0
        %1308 = vmatpush1.msra.mxu0 0.0
        %1309 = vmatprep.subr.mxu0 0.0
        %1310 = vmatpush1.msra.mxu0 0.0
        %1311 = vmatprep.subr.mxu0 0.0
        %1312 = vmatpush1.msra.mxu0 0.0
        %1313 = vmatprep.subr.mxu0 0.0
        %1314 = vmatpush1.msra.mxu0 0.0
        %1315 = vmatprep.subr.mxu0 0.0
        %1316 = vmatpush1.msra.mxu0 0.0
        %1317 = vmatprep.subr.mxu0 0.0
        %1318 = vmatpush1.msra.mxu0 0.0
        %1319 = vmatprep.subr.mxu0 0.0
        %1320 = vmatpush1.msra.mxu0 0.0
        %1321 = vmatprep.subr.mxu0 0.0
        %1322 = vmatpush1.msra.mxu0 0.0
        %1323 = vmatprep.subr.mxu0 0.0
        %1324 = vmatpush1.msra.mxu0 0.0
        %1325 = vmatprep.subr.mxu0 0.0
        %1326 = vmatpush1.msra.mxu0 0.0
        %1327 = vmatprep.subr.mxu0 0.0
        %1328 = vmatpush1.msra.mxu0 0.0
        %1329 = vmatprep.mubr.f32.mxu0 0.0
        %1330 = vmatmul.mubr.f32.gmra.mrb[0].mxu0 %v1263
        %v1331 = vpop.f32.mrb[0].mxu0
        %v1332 = vadd.f32 0.0, %v1331
        %v1333 = vpop.f32.mrb[0].mxu0
        %1334 = vdwg.mxu0
        %vm1335 = vcmask 261120
        %v1336 = vsel %vm1335, %v1113, 0.0
        %v1337 = vsel %vm1335, %v1186, 0.0
        %v1338 = vadd.f32 %v1336, %v1337
        %v1339 = vsel %vm1335, %v1259, 0.0
        %v1340 = vadd.f32 %v1338, %v1339
        %v1341 = vsel %vm1335, %v1332, 0.0
        %v1342 = vadd.f32 %v1340, %v1341
        %v1343 = vld [vmem:[%s4] sm:$0x1]
        %v1345 = vlaneseq
        %v1346 = vshrl.u32 %v1345, 7
        %v1347 = vsub.s32 0, %v1346
        %v1348 = vrot.slane %v1343, %v1347
        %v1350 = vadd.f32 %v1342, %v1348
        %v1351 = vld [vmem:[%s381] sm:$0xff]
        %v1352 = vadd.f32 %v1350, %v1351
        %1353 = vst.msk [vmem:[%s388] sm:$0xff] %vm1335, %v1352
        %v1354 = vsel %vm702, %v740, 0.0
        %v1355 = vsel %vm702, %v742, 0.0
        %v1356 = vadd.f32 %v1354, %v1355
        %v1357 = vsel %vm702, %v744, 0.0
        %v1358 = vadd.f32 %v1356, %v1357
        %v1359 = vsel %vm702, %v746, 0.0
        %v1360 = vadd.f32 %v1358, %v1359
        %v1361 = vrcp.pop 4.0
        %v1362 = vmul.f32 %v1360, %v1361
        %1363 = vst.msk [vmem:[%s356] sm:$0xff] %vm702, %v1362
        %p1364 = scmp.lt.s32.totalorder %s26, 1
        %s1365 = scalar_select %p1364, %s26, 1
        %p1366 = scmp.lt.s32.totalorder %s27, 0
        %s1367 = scalar_select %p1366, %s27, 0
        %s1368 = sadd.s32 %s1367, %s1365
        %s1369 = smul.addr %s1368, 8
        %s1370 = scalar_lea.vmem %s6, %s1369
        %s1371 = sand.u32 %s222, 1
        %s1372 = scalar_lea.sflag [#allocation3], %s1371
        %s1373 = sand.u32 %s222, 1
        %s1374 = smul.addr %s1373, 8
        %s1375 = scalar_lea.vmem [#allocation2], %s1374
        // Predicated region
        $region45: #{pre_transformer_summary_forward.6} parent=43 // pred_check
          %p1376 = pneg %p204
        $region46: #{pre_transformer_summary_forward.6} parent=43 // pred_check_branch
          %1378 = sbr.rel (%p1376) target = $region48
        $region47: #{pre_transformer_summary_forward.6} parent=43 // pred_region
          _
        $region48: #{pre_transformer_summary_forward.6} parent=43 // pred_fallthru
          _
        // Predicated region
        $region49: #{pre_transformer_summary_forward.6} parent=43 // pred_check
          %p1379 = pneg %p232
        $region50: #{pre_transformer_summary_forward.6} parent=43 // pred_check_branch
          %1381 = sbr.rel (%p1379) target = $region52
        $region51: #{pre_transformer_summary_forward.6} parent=43 // pred_region
          %s1383 = ssub.s32 128, 128
          %1384 = vsyncadd %s1372, %s1383
          %s1385 = sadd.s32 %s27, %s26
          %s1386 = smul.addr %s1385, 128
          %s1387 = scalar_lea.hbm %s7, %s1386
          %s1389 = sshll.u32 %s1375, 4
          %s1390 = int_to_ptr.vmem [resolvable:$true] %s1389
          %1392 = dma.vmem_to_hbm [thread:$0]  %s1390, 128, %s1387, %s1372
        $region52: #{pre_transformer_summary_forward.6} parent=43 // pred_fallthru
          _
      $region44: #{pre_transformer_summary_forward.6} parent=5 // pred_fallthru
        _
      %p1393 = scmp.le.s32.totalorder 2, %s17
      // Predicated region
      $region53: #{pre_transformer_summary_forward.6} parent=5 // pred_check
        %p1394 = pneg %p1393
      $region54: #{pre_transformer_summary_forward.6} parent=5 // pred_check_branch
        %1396 = sbr.rel (%p1394) target = $region56
      $region55: #{pre_transformer_summary_forward.6} parent=5 // pred_region
        %s1397 = ssub.s32 %s17, 2
        // Predicated region
        $region57: #{pre_transformer_summary_forward.6} parent=55 // pred_check
          %p1398 = pneg %p210
        $region58: #{pre_transformer_summary_forward.6} parent=55 // pred_check_branch
          %1400 = sbr.rel (%p1398) target = $region60
        $region59: #{pre_transformer_summary_forward.6} parent=55 // pred_region
          %p1401 = scmp.lt.s32.totalorder %s28, 1
          %s1402 = scalar_select %p1401, %s28, 1
          %p1403 = scmp.lt.s32.totalorder %s29, 0
          %s1404 = scalar_select %p1403, %s29, 0
          %s1405 = sadd.s32 %s1404, %s1402
          %s1406 = smul.addr %s1405, 8
          %s1407 = scalar_lea.vmem %s6, %s1406
        $region60: #{pre_transformer_summary_forward.6} parent=55 // pred_fallthru
          _
        // Predicated region
        $region61: #{pre_transformer_summary_forward.6} parent=55 // pred_check
          %p1408 = pneg %p238
        $region62: #{pre_transformer_summary_forward.6} parent=55 // pred_check_branch
          %1410 = sbr.rel (%p1408) target = $region64
        $region63: #{pre_transformer_summary_forward.6} parent=55 // pred_region
          %s1411 = sand.u32 %s223, 1
          %s1412 = scalar_lea.sflag [#allocation3], %s1411
          %s1413 = sand.u32 %s223, 1
          %s1414 = smul.addr %s1413, 8
          %s1415 = scalar_lea.vmem [#allocation2], %s1414
          %1416 = dma.done %s1412, 128
        $region64: #{pre_transformer_summary_forward.6} parent=55 // pred_fallthru
          _
      $region56: #{pre_transformer_summary_forward.6} parent=5 // pred_fallthru
        _
    $region6: #{pre_transformer_summary_forward.6} parent=1 // loop_footer
      %s21 = sadd.s32 1, %s17
    $region7: #{pre_transformer_summary_forward.6} parent=1 // loop_footer_branch
      %16 = sbr.rel target = $region3
    $region8: #{pre_transformer_summary_forward.6} parent=1 // loop_exit
      _
    %1417 = vsyncpa [#allocation3], 1
    %s1418 = scalar_lea.sflag [#allocation3], 1
    %1419 = vsyncpa %s1418, 1

</llo_original>
